<compile_context>
chip_gen: v6e
topology: v6e:2x2x1
jax: 0.10.0
libtpu: 0.0.40
codegen_flags: <defaults>
</compile_context>

<pallas_src>
import math

import jax
import jax.numpy as jnp
from jax import lax
from jax.experimental import pallas as pl
from jax.experimental.pallas import tpu as pltpu

MITR = 300        # max fixed-point iterations (ImplicitFunction default)
TOL = 3e-6        # convergence tolerance on inf-norm of X_{t+1} - X_t
KAPPA = 0.95
KAPPA_DIAG = 0.45
CHUNK = 10        # check-free iterations per convergence check; MITR % CHUNK == 0

_RHS_T = (((1,), (1,)), ((), ()))   # contract last dim of both operands (B @ U^T)


# ---------------------------------------------------------------------------
# Kernel: fixed-point loop + readout for one batch tile.
# ---------------------------------------------------------------------------
def _implicit_lora2_kernel(a_ref, b_ref, c_ref, d_ref, u_ref, out_ref,
                           x_ref, z_ref):
    # Z = B @ U^T  (U stays batch-major; MXU handles the transposed operand)
    z_ref[...] = lax.dot_general(b_ref[...], u_ref[...], _RHS_T,
                                 preferred_element_type=jnp.float32)
    x_ref[...] = jnp.zeros_like(x_ref)

    def step(A, X):
        return jnp.maximum(
            jnp.dot(A, X, preferred_element_type=jnp.float32) + z_ref[...], 0.0)

    def outer_cond(carry):
        it, done = carry
        return jnp.logical_and(it < MITR, done == 0)

    def outer_body(carry):
        it, _ = carry
        A = a_ref[...]
        X = x_ref[...]
        for _ in range(CHUNK - 1):          # check-free, fully unrolled
            X = step(A, X)
        X_new = step(A, X)
        err = jnp.max(jnp.abs(X_new - X))
        done = (err < TOL).astype(jnp.int32)
        # "break before assign": keep the pre-check iterate once converged.
        keep_old = jnp.broadcast_to(done, X.shape) > 0
        x_ref[...] = jnp.where(keep_old, X, X_new)
        return it + CHUNK, done

    lax.while_loop(outer_cond, outer_body, (jnp.int32(0), jnp.int32(0)))

    X = x_ref[...]
    out_ref[...] = (
        jnp.dot(c_ref[...], X, preferred_element_type=jnp.float32)
        + lax.dot_general(d_ref[...], u_ref[...], _RHS_T,
                          preferred_element_type=jnp.float32))


# ---------------------------------------------------------------------------
# Pure-JAX parameter projections (module + ImplicitFunctionInf semantics).
# ---------------------------------------------------------------------------
def _round_up(x, mult):
    return ((x + mult - 1) // mult) * mult


def _project_onto_linf_ball(a, v):
    """Scale a so its matrix inf-norm (max row L1 norm) is <= v."""
    nrm = jnp.max(jnp.sum(jnp.abs(a), axis=-1))
    return jnp.where(nrm > v, v * a / nrm, a)


def _project_rows_onto_l1_ball(a, v):
    """Row-wise projection onto the L1 ball of radius v (ImplicitFunctionInf's
    sorted soft-threshold projection, vectorized; no-op for rows inside the ball)."""
    ncol = a.shape[-1]
    a_abs = jnp.abs(a)
    row_sums = jnp.sum(a_abs, axis=-1)
    u = jnp.flip(jnp.sort(a_abs, axis=-1), axis=-1)             # descending
    css = jnp.cumsum(u, axis=-1)
    j = jnp.arange(1, ncol + 1, dtype=a.dtype)
    rho = jnp.sum((u * j > (css - v)).astype(jnp.int32), axis=-1)
    rho = jnp.maximum(rho, 1)
    css_rho = jnp.take_along_axis(css, (rho - 1)[:, None], axis=-1)[:, 0]
    alpha = (css_rho - v) / rho.astype(a.dtype)
    a_proj = jnp.sign(a) * jnp.maximum(a_abs - alpha[:, None], 0.0)
    return jnp.where((row_sums > v)[:, None], a_proj, a)


def _build_A(L, R, Diag, n):
    v_lr = math.sqrt(KAPPA - KAPPA_DIAG)
    L_p = _project_onto_linf_ball(L, v_lr)
    RT_p = _project_onto_linf_ball(R.T, v_lr)
    if Diag.size == n:                          # diag=True branch
        diag_mat = _project_onto_linf_ball(jnp.diag(Diag.reshape(-1)), KAPPA_DIAG)
    else:                                       # diag=False branch (scalar Diag)
        d = Diag.reshape(())
        # Matches the module exactly (kappa*d/(d+1e-10)); flips sign for d <= -kappa.
        # TODO(synk): use jnp.abs(d) in the denominator for a norm-preserving clamp.
        d = jnp.where(jnp.abs(d) > KAPPA, KAPPA * d / (d + 1e-10), d)
        diag_mat = d * jnp.eye(n, dtype=jnp.float32)
    A = diag_mat + L_p @ RT_p
    # ImplicitFunctionInf: project each row of A onto the L1 ball of radius kappa.
    return _project_rows_onto_l1_ball(A, KAPPA)


# ---------------------------------------------------------------------------
# Wrapper.
# ---------------------------------------------------------------------------
def implicit_model_lora2(U, params, *, m_tile_max=512):
    """Forward pass of ImplicitModelLoRA2 (f=ImplicitFunctionInf, bias=False).

    U: (m, p) batch-first (or (m, a, b), flattened).  Returns (m, q)."""
    L, R, Diag, B, C, D = (jnp.asarray(params[k], jnp.float32)
                           for k in ("L", "R", "Diag", "B", "C", "D"))
    if U.ndim == 3:
        U = U.reshape(U.shape[0], -1)
    U = U.astype(jnp.float32)
    # TODO(synk): the bias=True branch (append a row of ones to U) and an explicit
    # X0 warm start are not plumbed through; defaults match the module.
    n = L.shape[0]
    p = B.shape[1]
    q = C.shape[0]
    m = U.shape[0]
    assert U.shape[1] == p, f"Given input size {U.shape[1]} != expected {p}."

    A = _build_A(L, R, Diag, n)

    # Lane-dense batch padding / tiling (padded columns are exactly zero).
    if m <= m_tile_max:
        m_tile = _round_up(m, 128)
        m_pad = m_tile
    else:
        m_tile = m_tile_max
        m_pad = _round_up(m, m_tile)
    U_pad = jnp.pad(U, ((0, m_pad - m), (0, 0)))

    out = pl.pallas_call(
        _implicit_lora2_kernel,
        out_shape=jax.ShapeDtypeStruct((q, m_pad), jnp.float32),
        grid=(m_pad // m_tile,),
        in_specs=[
            pl.BlockSpec((n, n), lambda i: (0, 0)),        # A
            pl.BlockSpec((n, p), lambda i: (0, 0)),        # B
            pl.BlockSpec((q, n), lambda i: (0, 0)),        # C
            pl.BlockSpec((q, p), lambda i: (0, 0)),        # D
            pl.BlockSpec((m_tile, p), lambda i: (i, 0)),   # U (batch-major tiles)
        ],
        out_specs=pl.BlockSpec((q, m_tile), lambda i: (0, i)),  # lane-dense store
        scratch_shapes=[
            pltpu.VMEM((n, m_tile), jnp.float32),          # X
            pltpu.VMEM((n, m_tile), jnp.float32),          # Z = B U^T
        ],
        compiler_params=pltpu.CompilerParams(
            dimension_semantics=("parallel",),
            vmem_limit_bytes=32 * 1024 * 1024,
        ),
    )(A, B, C, D, U_pad)

    # Kernel output is feature-major (q, m_pad) so the in-loop store is
    # lane-dense; this tiny transpose + slice is wrapper glue.
    return out.T[:m]


# ---------------------------------------------------------------------------
# Pure-JAX reference mirroring the PyTorch module (exact per-iteration check).
# ---------------------------------------------------------------------------
def _reference(U, params):
    L, R, Diag, B, C, D = (jnp.asarray(params[k], jnp.float32)
                           for k in ("L", "R", "Diag", "B", "C", "D"))
    if U.ndim == 3:
        U = U.reshape(U.shape[0], -1)
    Ut = U.T.astype(jnp.float32)                 # (p, m), like transpose(U)
    n = L.shape[0]

    A = _build_A(L, R, Diag, n)
    Z = B @ Ut
    X0 = jnp.zeros((n, Ut.shape[1]), jnp.float32)

    def cond(c):
        i, _, done = c
        return jnp.logical_and(i < MITR, jnp.logical_not(done))

    def body(c):
        i, X, _ = c
        X_new = jnp.maximum(A @ X + Z, 0.0)
        err = jnp.max(jnp.abs(X_new - X))
        conv = err < TOL
        X = jnp.where(conv, X, X_new)            # break before X = X_new
        return i + 1, X, conv

    _, X, _ = lax.while_loop(cond, body, (jnp.int32(0), X0, jnp.array(False)))
    return (C @ X + D @ Ut).T


if __name__ == "__main__":
    # sizes: k (LoRA rank), n (hidden), p (input feats), q (classes), m (batch)
    k_, n, p, q, m = 4, 32, 16, 8, 8

    key = jax.random.PRNGKey(0)
    ks = jax.random.split(key, 7)
    params = {
        "L": jax.random.normal(ks[0], (n, k_), jnp.float32) / n,
        "R": jax.random.normal(ks[1], (n, k_), jnp.float32) / n,
        "Diag": jax.random.normal(ks[2], (1, 1), jnp.float32) / n,
        "B": jax.random.normal(ks[3], (n, p), jnp.float32) / n,
        "C": jax.random.normal(ks[4], (q, n), jnp.float32) / n,
        "D": jax.random.normal(ks[5], (q, p), jnp.float32) / n,
    }
    U = jax.random.normal(ks[6], (m, p), jnp.float32)

    out = jax.block_until_ready(implicit_model_lora2(U, params))
    assert out.shape == (m, q), out.shape

    ref = jax.block_until_ready(_reference(U, params))
    max_err = float(jnp.max(jnp.abs(out - ref)))
    assert max_err < 1e-4, max_err

    print("KERNEL_OK")
</pallas_src>

<mosaic_0001>
module attributes {stable_mosaic.version = 11 : i64} {
  func.func @_implicit_lora2_kernel(%arg0: i32, %arg1: memref<32x32xf32, #tpu.memory_space<vmem>>, %arg2: memref<32x16xf32, #tpu.memory_space<vmem>>, %arg3: memref<8x32xf32, #tpu.memory_space<vmem>>, %arg4: memref<8x16xf32, #tpu.memory_space<vmem>>, %arg5: memref<128x16xf32, #tpu.memory_space<vmem>>, %arg6: memref<8x128xf32, #tpu.memory_space<vmem>>, %arg7: memref<32x128xf32, #tpu.memory_space<vmem>>, %arg8: memref<32x128xf32, #tpu.memory_space<vmem>>) attributes {dimension_semantics = [#tpu.dimension_semantics<parallel>], iteration_bounds = array<i64: 1>, scalar_prefetch = 0 : i64, scratch_operands = 2 : i64, tpu.core_type = #tpu.core_type<tc>, window_params = [{pipeline_mode = #tpu.pipeline_mode<synchronous>, transform_indices = @transform_0, window_bounds = array<i64: 32, 32>}, {pipeline_mode = #tpu.pipeline_mode<synchronous>, transform_indices = @transform_1, window_bounds = array<i64: 32, 16>}, {pipeline_mode = #tpu.pipeline_mode<synchronous>, transform_indices = @transform_2, window_bounds = array<i64: 8, 32>}, {pipeline_mode = #tpu.pipeline_mode<synchronous>, transform_indices = @transform_3, window_bounds = array<i64: 8, 16>}, {transform_indices = @transform_4, window_bounds = array<i64: 128, 16>}, {transform_indices = @transform_5, window_bounds = array<i64: 8, 128>}]} {
    %c0 = arith.constant 0 : index
    %c0_0 = arith.constant 0 : index
    %0 = vector.load %arg2[%c0, %c0_0] : memref<32x16xf32, #tpu.memory_space<vmem>>, vector<32x16xf32>
    %c0_1 = arith.constant 0 : index
    %c0_2 = arith.constant 0 : index
    %1 = vector.load %arg5[%c0_1, %c0_2] : memref<128x16xf32, #tpu.memory_space<vmem>>, vector<128x16xf32>
    %cst = arith.constant dense<0.000000e+00> : vector<32x128xf32>
    %2 = tpu.matmul %0, %1, %cst {dimension_numbers = #tpu.dot_dimension_numbers<[1], [1], [0], [0], [0, 0, 1, 0], [], []>} : vector<32x16xf32>, vector<128x16xf32>, vector<32x128xf32> -> vector<32x128xf32>
    %c0_3 = arith.constant 0 : index
    %c0_4 = arith.constant 0 : index
    %3 = vector.load %arg8[%c0_3, %c0_4] : memref<32x128xf32, #tpu.memory_space<vmem>>, vector<32x128xf32>
    tpu.vector_store %arg8[%c0_3, %c0_4], %2 {strides = array<i32>} : memref<32x128xf32, #tpu.memory_space<vmem>>, vector<32x128xf32>,
    %cst_5 = arith.constant 0.000000e+00 : f32
    %4 = vector.broadcast %cst_5 : f32 to vector<32x128xf32>
    %c0_6 = arith.constant 0 : index
    %c0_7 = arith.constant 0 : index
    %5 = vector.load %arg7[%c0_6, %c0_7] : memref<32x128xf32, #tpu.memory_space<vmem>>, vector<32x128xf32>
    tpu.vector_store %arg7[%c0_6, %c0_7], %4 {strides = array<i32>} : memref<32x128xf32, #tpu.memory_space<vmem>>, vector<32x128xf32>,
    %c0_i32 = arith.constant 0 : i32
    %c0_i32_8 = arith.constant 0 : i32
    %6:2 = scf.while (%arg9 = %c0_i32, %arg10 = %c0_i32_8) : (i32, i32) -> (i32, i32) {
      %c300_i32 = arith.constant 300 : i32
      %15 = arith.cmpi slt, %arg9, %c300_i32 : i32
      %c0_i32_21 = arith.constant 0 : i32
      %16 = arith.cmpi eq, %arg10, %c0_i32_21 : i32
      %17 = arith.andi %15, %16 : i1
      scf.condition(%17) %arg9, %arg10 : i32, i32
    } do {
    ^bb0(%arg9: i32, %arg10: i32):
      %c0_21 = arith.constant 0 : index
      %c0_22 = arith.constant 0 : index
      %15 = vector.load %arg1[%c0_21, %c0_22] : memref<32x32xf32, #tpu.memory_space<vmem>>, vector<32x32xf32>
      %c0_23 = arith.constant 0 : index
      %c0_24 = arith.constant 0 : index
      %16 = vector.load %arg7[%c0_23, %c0_24] : memref<32x128xf32, #tpu.memory_space<vmem>>, vector<32x128xf32>
      %cst_25 = arith.constant dense<0.000000e+00> : vector<32x128xf32>
      %17 = tpu.matmul %15, %16, %cst_25 {dimension_numbers = #tpu.dot_dimension_numbers<[1], [0], [0], [1], [0, 0, 1, 1], [], []>} : vector<32x32xf32>, vector<32x128xf32>, vector<32x128xf32> -> vector<32x128xf32>
      %c0_26 = arith.constant 0 : index
      %c0_27 = arith.constant 0 : index
      %18 = vector.load %arg8[%c0_26, %c0_27] : memref<32x128xf32, #tpu.memory_space<vmem>>, vector<32x128xf32>
      %19 = arith.addf %17, %18 : vector<32x128xf32>
      %cst_28 = arith.constant 0.000000e+00 : f32
      %20 = vector.broadcast %cst_28 : f32 to vector<32x128xf32>
      %21 = arith.maximumf %19, %20 : vector<32x128xf32>
      %cst_29 = arith.constant dense<0.000000e+00> : vector<32x128xf32>
      %22 = tpu.matmul %15, %21, %cst_29 {dimension_numbers = #tpu.dot_dimension_numbers<[1], [0], [0], [1], [0, 0, 1, 1], [], []>} : vector<32x32xf32>, vector<32x128xf32>, vector<32x128xf32> -> vector<32x128xf32>
      %c0_30 = arith.constant 0 : index
      %c0_31 = arith.constant 0 : index
      %23 = vector.load %arg8[%c0_30, %c0_31] : memref<32x128xf32, #tpu.memory_space<vmem>>, vector<32x128xf32>
      %24 = arith.addf %22, %23 : vector<32x128xf32>
      %cst_32 = arith.constant 0.000000e+00 : f32
      %25 = vector.broadcast %cst_32 : f32 to vector<32x128xf32>
      %26 = arith.maximumf %24, %25 : vector<32x128xf32>
      %cst_33 = arith.constant dense<0.000000e+00> : vector<32x128xf32>
      %27 = tpu.matmul %15, %26, %cst_33 {dimension_numbers = #tpu.dot_dimension_numbers<[1], [0], [0], [1], [0, 0, 1, 1], [], []>} : vector<32x32xf32>, vector<32x128xf32>, vector<32x128xf32> -> vector<32x128xf32>
      %c0_34 = arith.constant 0 : index
      %c0_35 = arith.constant 0 : index
      %28 = vector.load %arg8[%c0_34, %c0_35] : memref<32x128xf32, #tpu.memory_space<vmem>>, vector<32x128xf32>
      %29 = arith.addf %27, %28 : vector<32x128xf32>
      %cst_36 = arith.constant 0.000000e+00 : f32
      %30 = vector.broadcast %cst_36 : f32 to vector<32x128xf32>
      %31 = arith.maximumf %29, %30 : vector<32x128xf32>
      %cst_37 = arith.constant dense<0.000000e+00> : vector<32x128xf32>
      %32 = tpu.matmul %15, %31, %cst_37 {dimension_numbers = #tpu.dot_dimension_numbers<[1], [0], [0], [1], [0, 0, 1, 1], [], []>} : vector<32x32xf32>, vector<32x128xf32>, vector<32x128xf32> -> vector<32x128xf32>
      %c0_38 = arith.constant 0 : index
      %c0_39 = arith.constant 0 : index
      %33 = vector.load %arg8[%c0_38, %c0_39] : memref<32x128xf32, #tpu.memory_space<vmem>>, vector<32x128xf32>
      %34 = arith.addf %32, %33 : vector<32x128xf32>
      %cst_40 = arith.constant 0.000000e+00 : f32
      %35 = vector.broadcast %cst_40 : f32 to vector<32x128xf32>
      %36 = arith.maximumf %34, %35 : vector<32x128xf32>
      %cst_41 = arith.constant dense<0.000000e+00> : vector<32x128xf32>
      %37 = tpu.matmul %15, %36, %cst_41 {dimension_numbers = #tpu.dot_dimension_numbers<[1], [0], [0], [1], [0, 0, 1, 1], [], []>} : vector<32x32xf32>, vector<32x128xf32>, vector<32x128xf32> -> vector<32x128xf32>
      %c0_42 = arith.constant 0 : index
      %c0_43 = arith.constant 0 : index
      %38 = vector.load %arg8[%c0_42, %c0_43] : memref<32x128xf32, #tpu.memory_space<vmem>>, vector<32x128xf32>
      %39 = arith.addf %37, %38 : vector<32x128xf32>
      %cst_44 = arith.constant 0.000000e+00 : f32
      %40 = vector.broadcast %cst_44 : f32 to vector<32x128xf32>
      %41 = arith.maximumf %39, %40 : vector<32x128xf32>
      %cst_45 = arith.constant dense<0.000000e+00> : vector<32x128xf32>
      %42 = tpu.matmul %15, %41, %cst_45 {dimension_numbers = #tpu.dot_dimension_numbers<[1], [0], [0], [1], [0, 0, 1, 1], [], []>} : vector<32x32xf32>, vector<32x128xf32>, vector<32x128xf32> -> vector<32x128xf32>
      %c0_46 = arith.constant 0 : index
      %c0_47 = arith.constant 0 : index
      %43 = vector.load %arg8[%c0_46, %c0_47] : memref<32x128xf32, #tpu.memory_space<vmem>>, vector<32x128xf32>
      %44 = arith.addf %42, %43 : vector<32x128xf32>
      %cst_48 = arith.constant 0.000000e+00 : f32
      %45 = vector.broadcast %cst_48 : f32 to vector<32x128xf32>
      %46 = arith.maximumf %44, %45 : vector<32x128xf32>
      %cst_49 = arith.constant dense<0.000000e+00> : vector<32x128xf32>
      %47 = tpu.matmul %15, %46, %cst_49 {dimension_numbers = #tpu.dot_dimension_numbers<[1], [0], [0], [1], [0, 0, 1, 1], [], []>} : vector<32x32xf32>, vector<32x128xf32>, vector<32x128xf32> -> vector<32x128xf32>
      %c0_50 = arith.constant 0 : index
      %c0_51 = arith.constant 0 : index
      %48 = vector.load %arg8[%c0_50, %c0_51] : memref<32x128xf32, #tpu.memory_space<vmem>>, vector<32x128xf32>
      %49 = arith.addf %47, %48 : vector<32x128xf32>
      %cst_52 = arith.constant 0.000000e+00 : f32
      %50 = vector.broadcast %cst_52 : f32 to vector<32x128xf32>
      %51 = arith.maximumf %49, %50 : vector<32x128xf32>
      %cst_53 = arith.constant dense<0.000000e+00> : vector<32x128xf32>
      %52 = tpu.matmul %15, %51, %cst_53 {dimension_numbers = #tpu.dot_dimension_numbers<[1], [0], [0], [1], [0, 0, 1, 1], [], []>} : vector<32x32xf32>, vector<32x128xf32>, vector<32x128xf32> -> vector<32x128xf32>
      %c0_54 = arith.constant 0 : index
      %c0_55 = arith.constant 0 : index
      %53 = vector.load %arg8[%c0_54, %c0_55] : memref<32x128xf32, #tpu.memory_space<vmem>>, vector<32x128xf32>
      %54 = arith.addf %52, %53 : vector<32x128xf32>
      %cst_56 = arith.constant 0.000000e+00 : f32
      %55 = vector.broadcast %cst_56 : f32 to vector<32x128xf32>
      %56 = arith.maximumf %54, %55 : vector<32x128xf32>
      %cst_57 = arith.constant dense<0.000000e+00> : vector<32x128xf32>
      %57 = tpu.matmul %15, %56, %cst_57 {dimension_numbers = #tpu.dot_dimension_numbers<[1], [0], [0], [1], [0, 0, 1, 1], [], []>} : vector<32x32xf32>, vector<32x128xf32>, vector<32x128xf32> -> vector<32x128xf32>
      %c0_58 = arith.constant 0 : index
      %c0_59 = arith.constant 0 : index
      %58 = vector.load %arg8[%c0_58, %c0_59] : memref<32x128xf32, #tpu.memory_space<vmem>>, vector<32x128xf32>
      %59 = arith.addf %57, %58 : vector<32x128xf32>
      %cst_60 = arith.constant 0.000000e+00 : f32
      %60 = vector.broadcast %cst_60 : f32 to vector<32x128xf32>
      %61 = arith.maximumf %59, %60 : vector<32x128xf32>
      %cst_61 = arith.constant dense<0.000000e+00> : vector<32x128xf32>
      %62 = tpu.matmul %15, %61, %cst_61 {dimension_numbers = #tpu.dot_dimension_numbers<[1], [0], [0], [1], [0, 0, 1, 1], [], []>} : vector<32x32xf32>, vector<32x128xf32>, vector<32x128xf32> -> vector<32x128xf32>
      %c0_62 = arith.constant 0 : index
      %c0_63 = arith.constant 0 : index
      %63 = vector.load %arg8[%c0_62, %c0_63] : memref<32x128xf32, #tpu.memory_space<vmem>>, vector<32x128xf32>
      %64 = arith.addf %62, %63 : vector<32x128xf32>
      %cst_64 = arith.constant 0.000000e+00 : f32
      %65 = vector.broadcast %cst_64 : f32 to vector<32x128xf32>
      %66 = arith.maximumf %64, %65 : vector<32x128xf32>
      %67 = arith.subf %66, %61 : vector<32x128xf32>
      %68 = math.absf %67 : vector<32x128xf32>
      %69 = vector.shape_cast %68 : vector<32x128xf32> to vector<1x32x128xf32>
      %cst_65 = arith.constant dense<0xFF800000> : vector<1xf32>
      %70 = vector.multi_reduction <maximumf>, %69, %cst_65 [1, 2] : vector<1x32x128xf32> to vector<1xf32>
      %71 = vector.shape_cast %70 : vector<1xf32> to vector<1x1x1xf32>
      %72 = vector.extract %71[0, 0, 0] : f32 from vector<1x1x1xf32>
      %cst_66 = arith.constant 3.000000e-06 : f32
      %73 = arith.cmpf olt, %72, %cst_66 : f32
      %74 = arith.extui %73 : i1 to i32
      %75 = vector.broadcast %74 : i32 to vector<32x128xi32>
      %c0_i32_67 = arith.constant 0 : i32
      %76 = vector.broadcast %c0_i32_67 : i32 to vector<32x128xi32>
      %77 = arith.cmpi sgt, %75, %76 : vector<32x128xi32>
      %78 = arith.select %77, %61, %66 : vector<32x128xi1>, vector<32x128xf32>
      %c0_68 = arith.constant 0 : index
      %c0_69 = arith.constant 0 : index
      %79 = vector.load %arg7[%c0_68, %c0_69] : memref<32x128xf32, #tpu.memory_space<vmem>>, vector<32x128xf32>
      tpu.vector_store %arg7[%c0_68, %c0_69], %78 {strides = array<i32>} : memref<32x128xf32, #tpu.memory_space<vmem>>, vector<32x128xf32>,
      %c10_i32 = arith.constant 10 : i32
      %80 = arith.addi %arg9, %c10_i32 : i32
      scf.yield %80, %74 : i32, i32
    }
    %c0_9 = arith.constant 0 : index
    %c0_10 = arith.constant 0 : index
    %7 = vector.load %arg7[%c0_9, %c0_10] : memref<32x128xf32, #tpu.memory_space<vmem>>, vector<32x128xf32>
    %c0_11 = arith.constant 0 : index
    %c0_12 = arith.constant 0 : index
    %8 = vector.load %arg3[%c0_11, %c0_12] : memref<8x32xf32, #tpu.memory_space<vmem>>, vector<8x32xf32>
    %cst_13 = arith.constant dense<0.000000e+00> : vector<8x128xf32>
    %9 = tpu.matmul %8, %7, %cst_13 {dimension_numbers = #tpu.dot_dimension_numbers<[1], [0], [0], [1], [0, 0, 1, 1], [], []>} : vector<8x32xf32>, vector<32x128xf32>, vector<8x128xf32> -> vector<8x128xf32>
    %c0_14 = arith.constant 0 : index
    %c0_15 = arith.constant 0 : index
    %10 = vector.load %arg4[%c0_14, %c0_15] : memref<8x16xf32, #tpu.memory_space<vmem>>, vector<8x16xf32>
    %c0_16 = arith.constant 0 : index
    %c0_17 = arith.constant 0 : index
    %11 = vector.load %arg5[%c0_16, %c0_17] : memref<128x16xf32, #tpu.memory_space<vmem>>, vector<128x16xf32>
    %cst_18 = arith.constant dense<0.000000e+00> : vector<8x128xf32>
    %12 = tpu.matmul %10, %11, %cst_18 {dimension_numbers = #tpu.dot_dimension_numbers<[1], [1], [0], [0], [0, 0, 1, 0], [], []>} : vector<8x16xf32>, vector<128x16xf32>, vector<8x128xf32> -> vector<8x128xf32>
    %13 = arith.addf %9, %12 : vector<8x128xf32>
    %c0_19 = arith.constant 0 : index
    %c0_20 = arith.constant 0 : index
    %14 = vector.load %arg6[%c0_19, %c0_20] : memref<8x128xf32, #tpu.memory_space<vmem>>, vector<8x128xf32>
    tpu.vector_store %arg6[%c0_19, %c0_20], %13 {strides = array<i32>} : memref<8x128xf32, #tpu.memory_space<vmem>>, vector<8x128xf32>,
    return
  }
  func.func @transform_0(%arg0: i32) -> (i32, i32) {
    %c0_i32 = arith.constant 0 : i32
    %c0_i32_0 = arith.constant 0 : i32
    %c0_i32_1 = arith.constant 0 : i32
    return %c0_i32, %c0_i32_0 : i32, i32
  }
  func.func @transform_1(%arg0: i32) -> (i32, i32) {
    %c0_i32 = arith.constant 0 : i32
    %c0_i32_0 = arith.constant 0 : i32
    %c0_i32_1 = arith.constant 0 : i32
    return %c0_i32, %c0_i32_0 : i32, i32
  }
  func.func @transform_2(%arg0: i32) -> (i32, i32) {
    %c0_i32 = arith.constant 0 : i32
    %c0_i32_0 = arith.constant 0 : i32
    %c0_i32_1 = arith.constant 0 : i32
    return %c0_i32, %c0_i32_0 : i32, i32
  }
  func.func @transform_3(%arg0: i32) -> (i32, i32) {
    %c0_i32 = arith.constant 0 : i32
    %c0_i32_0 = arith.constant 0 : i32
    %c0_i32_1 = arith.constant 0 : i32
    return %c0_i32, %c0_i32_0 : i32, i32
  }
  func.func @transform_4(%arg0: i32) -> (i32, i32) {
    %c0_i32 = arith.constant 0 : i32
    %c0_i32_0 = arith.constant 0 : i32
    return %arg0, %c0_i32 : i32, i32
  }
  func.func @transform_5(%arg0: i32) -> (i32, i32) {
    %c0_i32 = arith.constant 0 : i32
    %c0_i32_0 = arith.constant 0 : i32
    return %c0_i32, %arg0 : i32, i32
  }
}

</mosaic_0001>

<llo_original>
// kernel: tpu_custom_call.1
$region0: #{tpu_custom_call.1}
  #allocation0 [shape = 'u32[]', space=smem, size = 0x4, offset = 0x4, fixed_abs, tag = 'smem constant byte address 0x4 - core index']
  #allocation1 [shape = 'u32[144,128]{1,0:T(1,128)}', space=vmem, size = 0x12000, scoped, tag = 'internal scratch']
  #allocation2 [shape = 'f32[32,128]{1,0:T(8,128)}', space=vmem, size = 0x4000, scoped, tag = 'scratch operand']
  #allocation3 [shape = 'f32[32,128]{1,0:T(8,128)}', space=vmem, size = 0x4000, scoped, tag = 'scratch operand']
  %s0 = inlined_call_operand.vmem [shape: f32[32,32], index: 0, kind: input, shape index: {}]
  %s1 = inlined_call_operand.vmem [shape: f32[32,16], index: 1, kind: input, shape index: {}]
  %s2 = inlined_call_operand.vmem [shape: f32[8,32], index: 2, kind: input, shape index: {}]
  %s3 = inlined_call_operand.vmem [shape: f32[8,16], index: 3, kind: input, shape index: {}]
  %s4 = inlined_call_operand.vmem [shape: f32[128,16], index: 4, kind: input, shape index: {}]
  %s5 = inlined_call_operand.hbm [shape: f32[8,128], index: 5, kind: output, shape index: {}]
  %s6 = sld [smem:[#allocation0]]
  $region37: #{tpu_custom_call.1} parent=0
    _
  %s8 = ssub.s32 1, %s6
  %s9 = scalar_select 0, %s8, %s6
  $region1: #{tpu_custom_call.1} parent=0
    #allocation4 [shape = 'u8[4096]{0}', space=vmem, size = 0x1000, scoped, tag = 'output window, operand 0, single buffered']
    #allocation5 [shape = 's32[1]{0}', space=sflag, size = 0x4, scoped, tag = 'scoped memory for tpu_custom_call.1']
    %10 = vsyncpa [#allocation5], 0
    // Predicated region
    $region2: #{tpu_custom_call.1} parent=1 // pred_check
      _
    $region3: #{tpu_custom_call.1} parent=1 // pred_check_branch
      %12 = sbr.rel (0) target = $region5
    $region4: #{tpu_custom_call.1} parent=1 // pred_region
      _
    $region5: #{tpu_custom_call.1} parent=1 // pred_fallthru
      _
    // Predicated region
    $region6: #{tpu_custom_call.1} parent=1 // pred_check
      _
    $region7: #{tpu_custom_call.1} parent=1 // pred_check_branch
      %14 = sbr.rel (0) target = $region9
    $region8: #{tpu_custom_call.1} parent=1 // pred_region
      _
    $region9: #{tpu_custom_call.1} parent=1 // pred_fallthru
      _
    // Predicated region
    $region10: #{tpu_custom_call.1} parent=1 // pred_check
      _
    $region11: #{tpu_custom_call.1} parent=1 // pred_check_branch
      %16 = sbr.rel (0) target = $region13
    $region12: #{tpu_custom_call.1} parent=1 // pred_region
      _
    $region13: #{tpu_custom_call.1} parent=1 // pred_fallthru
      _
    // Predicated region
    $region14: #{tpu_custom_call.1} parent=1 // pred_check
      _
    $region15: #{tpu_custom_call.1} parent=1 // pred_check_branch
      %18 = sbr.rel (0) target = $region17
    $region16: #{tpu_custom_call.1} parent=1 // pred_region
      _
    $region17: #{tpu_custom_call.1} parent=1 // pred_fallthru
      _
    // Predicated region
    $region18: #{tpu_custom_call.1} parent=1 // pred_check
      _
    $region19: #{tpu_custom_call.1} parent=1 // pred_check_branch
      %20 = sbr.rel (0) target = $region21
    $region20: #{tpu_custom_call.1} parent=1 // pred_region
      _
    $region21: #{tpu_custom_call.1} parent=1 // pred_fallthru
      _
    %v21 = vld [vmem:[%s1] sm:$0xff]
    %v22 = vld [vmem:[%s1 + $0x8] sm:$0xff]
    %v23 = vld [vmem:[%s1 + $0x10] sm:$0xff]
    %v24 = vld [vmem:[%s1 + $0x18] sm:$0xff]
    %v25 = vld [vmem:[%s4] sm:$0xff]
    %v26 = vld [vmem:[%s4 + $0x8] sm:$0xff]
    %v27 = vld [vmem:[%s4 + $0x10] sm:$0xff]
    %v28 = vld [vmem:[%s4 + $0x18] sm:$0xff]
    %v29 = vld [vmem:[%s4 + $0x20] sm:$0xff]
    %v30 = vld [vmem:[%s4 + $0x28] sm:$0xff]
    %v31 = vld [vmem:[%s4 + $0x30] sm:$0xff]
    %v32 = vld [vmem:[%s4 + $0x38] sm:$0xff]
    %v33 = vld [vmem:[%s4 + $0x40] sm:$0xff]
    %v34 = vld [vmem:[%s4 + $0x48] sm:$0xff]
    %v35 = vld [vmem:[%s4 + $0x50] sm:$0xff]
    %v36 = vld [vmem:[%s4 + $0x58] sm:$0xff]
    %v37 = vld [vmem:[%s4 + $0x60] sm:$0xff]
    %v38 = vld [vmem:[%s4 + $0x68] sm:$0xff]
    %v39 = vld [vmem:[%s4 + $0x70] sm:$0xff]
    %v40 = vld [vmem:[%s4 + $0x78] sm:$0xff]
    %vm41 = vcmask 130048
    %v43 = vsel %vm41, %v21, 0
    %v46 = vsel %vm41, %v22, 0
    %v49 = vsel %vm41, %v23, 0
    %v52 = vsel %vm41, %v24, 0
    %v55 = vsel %vm41, %v25, 0
    %v58 = vsel %vm41, %v26, 0
    %v61 = vsel %vm41, %v27, 0
    %v64 = vsel %vm41, %v28, 0
    %v67 = vsel %vm41, %v29, 0
    %v70 = vsel %vm41, %v30, 0
    %v73 = vsel %vm41, %v31, 0
    %v76 = vsel %vm41, %v32, 0
    %v79 = vsel %vm41, %v33, 0
    %v82 = vsel %vm41, %v34, 0
    %v85 = vsel %vm41, %v35, 0
    %v88 = vsel %vm41, %v36, 0
    %v91 = vsel %vm41, %v37, 0
    %v94 = vsel %vm41, %v38, 0
    %v97 = vsel %vm41, %v39, 0
    %v100 = vsel %vm41, %v40, 0
    %102 = vmatprep.subr.mxu0 0.0
    %103 = vmatpush1.xpose.msra.mxu0 %v100
    %104 = vmatprep.subr.mxu0 0.0
    %105 = vmatpush1.xpose.msra.mxu0 %v97
    %106 = vmatprep.subr.mxu0 0.0
    %107 = vmatpush1.xpose.msra.mxu0 %v94
    %108 = vmatprep.subr.mxu0 0.0
    %109 = vmatpush1.xpose.msra.mxu0 %v91
    %110 = vmatprep.subr.mxu0 0.0
    %111 = vmatpush1.xpose.msra.mxu0 %v88
    %112 = vmatprep.subr.mxu0 0.0
    %113 = vmatpush1.xpose.msra.mxu0 %v85
    %114 = vmatprep.subr.mxu0 0.0
    %115 = vmatpush1.xpose.msra.mxu0 %v82
    %116 = vmatprep.subr.mxu0 0.0
    %117 = vmatpush1.xpose.msra.mxu0 %v79
    %118 = vmatprep.subr.mxu0 0.0
    %119 = vmatpush1.xpose.msra.mxu0 %v76
    %120 = vmatprep.subr.mxu0 0.0
    %121 = vmatpush1.xpose.msra.mxu0 %v73
    %122 = vmatprep.subr.mxu0 0.0
    %123 = vmatpush1.xpose.msra.mxu0 %v70
    %124 = vmatprep.subr.mxu0 0.0
    %125 = vmatpush1.xpose.msra.mxu0 %v67
    %126 = vmatprep.subr.mxu0 0.0
    %127 = vmatpush1.xpose.msra.mxu0 %v64
    %128 = vmatprep.subr.mxu0 0.0
    %129 = vmatpush1.xpose.msra.mxu0 %v61
    %130 = vmatprep.subr.mxu0 0.0
    %131 = vmatpush1.xpose.msra.mxu0 %v58
    %132 = vmatprep.subr.mxu0 0.0
    %133 = vmatpush1.xpose.msra.mxu0 %v55
    %134 = vmatprep.subr.mxu0 0.0
    %135 = vmatpush2.xpose.msra.mxu0 0.0
    %136 = vmatprep.subr.mxu0 0.0
    %137 = vmatpush2.xpose.msra.mxu0 0.0
    %138 = vmatprep.subr.mxu0 0.0
    %139 = vmatpush2.xpose.msra.mxu0 0.0
    %140 = vmatprep.subr.mxu0 0.0
    %141 = vmatpush2.xpose.msra.mxu0 0.0
    %142 = vmatprep.subr.mxu0 0.0
    %143 = vmatpush2.xpose.msra.mxu0 0.0
    %144 = vmatprep.subr.mxu0 0.0
    %145 = vmatpush2.xpose.msra.mxu0 0.0
    %146 = vmatprep.subr.mxu0 0.0
    %147 = vmatpush2.xpose.msra.mxu0 0.0
    %148 = vmatprep.subr.mxu0 0.0
    %149 = vmatpush2.xpose.msra.mxu0 0.0
    %150 = vmatprep.subr.mxu0 0.0
    %151 = vmatpush2.xpose.msra.mxu0 0.0
    %152 = vmatprep.subr.mxu0 0.0
    %153 = vmatpush2.xpose.msra.mxu0 0.0
    %154 = vmatprep.subr.mxu0 0.0
    %155 = vmatpush2.xpose.msra.mxu0 0.0
    %156 = vmatprep.subr.mxu0 0.0
    %157 = vmatpush2.xpose.msra.mxu0 0.0
    %158 = vmatprep.subr.mxu0 0.0
    %159 = vmatpush2.xpose.msra.mxu0 0.0
    %160 = vmatprep.subr.mxu0 0.0
    %161 = vmatpush2.xpose.msra.mxu0 0.0
    %162 = vmatprep.subr.mxu0 0.0
    %163 = vmatpush2.xpose.msra.mxu0 0.0
    %164 = vmatprep.subr.mxu0 0.0
    %165 = vmatpush2.xpose.msra.mxu0 0.0
    %166 = vmatprep.mubr.f32.mxu0 0.0
    %167 = vmatmul.mubr.f32.gmra.mxu0 %v43
    %v168 = vpop.f32.mrf.mxu0
    %v169 = vadd.f32 0.0, %v168
    %v170 = vpop.f32.mrf.mxu0
    %171 = vmatprep.mubr.f32.mxu0 0.0
    %172 = vmatmul.mubr.f32.gmra.mxu0 %v46
    %v173 = vpop.f32.mrf.mxu0
    %v174 = vadd.f32 0.0, %v173
    %v175 = vpop.f32.mrf.mxu0
    %176 = vmatprep.mubr.f32.mxu0 0.0
    %177 = vmatmul.mubr.f32.gmra.mxu0 %v49
    %v178 = vpop.f32.mrf.mxu0
    %v179 = vadd.f32 0.0, %v178
    %v180 = vpop.f32.mrf.mxu0
    %181 = vmatprep.mubr.f32.mxu0 0.0
    %182 = vmatmul.mubr.f32.gmra.mxu0 %v52
    %v183 = vpop.f32.mrf.mxu0
    %v184 = vadd.f32 0.0, %v183
    %v185 = vpop.f32.mrf.mxu0
    %186 = vdwg.mxu0
    %187 = vst [vmem:[#allocation3] sm:$0xff] %v169
    %188 = vst [vmem:[#allocation3 + $0x8] sm:$0xff] %v174
    %189 = vst [vmem:[#allocation3 + $0x10] sm:$0xff] %v179
    %190 = vst [vmem:[#allocation3 + $0x18] sm:$0xff] %v184
    %191 = vst [vmem:[#allocation2] sm:$0xff] 0.0
    %192 = vst [vmem:[#allocation2 + $0x8] sm:$0xff] 0.0
    %193 = vst [vmem:[#allocation2 + $0x10] sm:$0xff] 0.0
    %194 = vst [vmem:[#allocation2 + $0x18] sm:$0xff] 0.0
    // While loop
    $region22: #{tpu_custom_call.1} parent=1 // loop_pre_header
      _
    $region23: #{tpu_custom_call.1} parent=1 // loop_header
      %s196 = sphi 0, %s1151
      %s197 = sphi 0, %s1140
      %p198 = scmp.lt.s32.totalorder %s196, 300
      %p199 = scmp.eq.s32.totalorder %s197, 0
      %p200 = pnand %p198, %p199
      %p201 = pneg %p200
    $region24: #{tpu_custom_call.1} parent=1 // loop_header_branch
      %203 = sbr.rel (%p200) target = $region28
    $region25: #{tpu_custom_call.1} parent=1 // loop_body
      %v204 = vld [vmem:[%s0] sm:$0xff]
      %v205 = vld [vmem:[%s0 + $0x8] sm:$0xff]
      %v206 = vld [vmem:[%s0 + $0x10] sm:$0xff]
      %v207 = vld [vmem:[%s0 + $0x18] sm:$0xff]
      %v208 = vld [vmem:[#allocation2] sm:$0xff]
      %v209 = vld [vmem:[#allocation2 + $0x8] sm:$0xff]
      %v210 = vld [vmem:[#allocation2 + $0x10] sm:$0xff]
      %v211 = vld [vmem:[#allocation2 + $0x18] sm:$0xff]
      %v212 = vld [vmem:[#allocation3] sm:$0xff]
      %v213 = vld [vmem:[#allocation3 + $0x8] sm:$0xff]
      %v214 = vld [vmem:[#allocation3 + $0x10] sm:$0xff]
      %v215 = vld [vmem:[#allocation3 + $0x18] sm:$0xff]
      %vm216 = vcmask 261120
      %v218 = vsel %vm216, %v204, 0
      %v221 = vsel %vm216, %v205, 0
      %v224 = vsel %vm216, %v206, 0
      %v227 = vsel %vm216, %v207, 0
      %229 = vmatprep.subr.mxu0 0.0
      %230 = vmatpush1.msra.mxu0 0.0
      %231 = vmatprep.subr.mxu0 0.0
      %232 = vmatpush1.msra.mxu0 0.0
      %233 = vmatprep.subr.mxu0 0.0
      %234 = vmatpush1.msra.mxu0 0.0
      %235 = vmatprep.subr.mxu0 0.0
      %236 = vmatpush1.msra.mxu0 0.0
      %237 = vmatprep.subr.mxu0 0.0
      %238 = vmatpush1.msra.mxu0 0.0
      %239 = vmatprep.subr.mxu0 0.0
      %240 = vmatpush1.msra.mxu0 0.0
      %241 = vmatprep.subr.mxu0 0.0
      %242 = vmatpush1.msra.mxu0 0.0
      %243 = vmatprep.subr.mxu0 0.0
      %244 = vmatpush1.msra.mxu0 0.0
      %245 = vmatprep.subr.mxu0 0.0
      %246 = vmatpush1.msra.mxu0 0.0
      %247 = vmatprep.subr.mxu0 0.0
      %248 = vmatpush1.msra.mxu0 0.0
      %249 = vmatprep.subr.mxu0 0.0
      %250 = vmatpush1.msra.mxu0 0.0
      %251 = vmatprep.subr.mxu0 0.0
      %252 = vmatpush1.msra.mxu0 0.0
      %253 = vmatprep.subr.mxu0 0.0
      %254 = vmatpush1.msra.mxu0 %v211
      %255 = vmatprep.subr.mxu0 0.0
      %256 = vmatpush1.msra.mxu0 %v210
      %257 = vmatprep.subr.mxu0 0.0
      %258 = vmatpush1.msra.mxu0 %v209
      %259 = vmatprep.subr.mxu0 0.0
      %260 = vmatpush1.msra.mxu0 %v208
      %261 = vmatprep.subr.mxu0 0.0
      %262 = vmatpush2.msra.mxu0 0.0
      %263 = vmatprep.subr.mxu0 0.0
      %264 = vmatpush2.msra.mxu0 0.0
      %265 = vmatprep.subr.mxu0 0.0
      %266 = vmatpush2.msra.mxu0 0.0
      %267 = vmatprep.subr.mxu0 0.0
      %268 = vmatpush2.msra.mxu0 0.0
      %269 = vmatprep.subr.mxu0 0.0
      %270 = vmatpush2.msra.mxu0 0.0
      %271 = vmatprep.subr.mxu0 0.0
      %272 = vmatpush2.msra.mxu0 0.0
      %273 = vmatprep.subr.mxu0 0.0
      %274 = vmatpush2.msra.mxu0 0.0
      %275 = vmatprep.subr.mxu0 0.0
      %276 = vmatpush2.msra.mxu0 0.0
      %277 = vmatprep.subr.mxu0 0.0
      %278 = vmatpush2.msra.mxu0 0.0
      %279 = vmatprep.subr.mxu0 0.0
      %280 = vmatpush2.msra.mxu0 0.0
      %281 = vmatprep.subr.mxu0 0.0
      %282 = vmatpush2.msra.mxu0 0.0
      %283 = vmatprep.subr.mxu0 0.0
      %284 = vmatpush2.msra.mxu0 0.0
      %285 = vmatprep.subr.mxu0 0.0
      %286 = vmatpush2.msra.mxu0 0.0
      %287 = vmatprep.subr.mxu0 0.0
      %288 = vmatpush2.msra.mxu0 0.0
      %289 = vmatprep.subr.mxu0 0.0
      %290 = vmatpush2.msra.mxu0 0.0
      %291 = vmatprep.subr.mxu0 0.0
      %292 = vmatpush2.msra.mxu0 0.0
      %293 = vmatprep.mubr.f32.mxu0 0.0
      %294 = vmatmul.mubr.f32.gmra.mxu0 %v218
      %v295 = vpop.f32.mrf.mxu0
      %v296 = vadd.f32 %v212, %v295
      %v297 = vpop.f32.mrf.mxu0
      %298 = vmatprep.mubr.f32.mxu0 0.0
      %299 = vmatmul.mubr.f32.gmra.mxu0 %v221
      %v300 = vpop.f32.mrf.mxu0
      %v301 = vadd.f32 %v213, %v300
      %v302 = vpop.f32.mrf.mxu0
      %303 = vmatprep.mubr.f32.mxu0 0.0
      %304 = vmatmul.mubr.f32.gmra.mxu0 %v224
      %v305 = vpop.f32.mrf.mxu0
      %v306 = vadd.f32 %v214, %v305
      %v307 = vpop.f32.mrf.mxu0
      %308 = vmatprep.mubr.f32.mxu0 0.0
      %309 = vmatmul.mubr.f32.gmra.mxu0 %v227
      %v310 = vpop.f32.mrf.mxu0
      %v311 = vadd.f32 %v215, %v310
      %v312 = vpop.f32.mrf.mxu0
      %313 = vdwg.mxu0
      %v314 = vmax.f32 %v296, 0.0
      %v315 = vmax.f32 %v301, 0.0
      %v316 = vmax.f32 %v306, 0.0
      %v317 = vmax.f32 %v311, 0.0
      %318 = vmatprep.subr.mxu0 0.0
      %319 = vmatpush1.msra.mxu0 0.0
      %320 = vmatprep.subr.mxu0 0.0
      %321 = vmatpush1.msra.mxu0 0.0
      %322 = vmatprep.subr.mxu0 0.0
      %323 = vmatpush1.msra.mxu0 0.0
      %324 = vmatprep.subr.mxu0 0.0
      %325 = vmatpush1.msra.mxu0 0.0
      %326 = vmatprep.subr.mxu0 0.0
      %327 = vmatpush1.msra.mxu0 0.0
      %328 = vmatprep.subr.mxu0 0.0
      %329 = vmatpush1.msra.mxu0 0.0
      %330 = vmatprep.subr.mxu0 0.0
      %331 = vmatpush1.msra.mxu0 0.0
      %332 = vmatprep.subr.mxu0 0.0
      %333 = vmatpush1.msra.mxu0 0.0
      %334 = vmatprep.subr.mxu0 0.0
      %335 = vmatpush1.msra.mxu0 0.0
      %336 = vmatprep.subr.mxu0 0.0
      %337 = vmatpush1.msra.mxu0 0.0
      %338 = vmatprep.subr.mxu0 0.0
      %339 = vmatpush1.msra.mxu0 0.0
      %340 = vmatprep.subr.mxu0 0.0
      %341 = vmatpush1.msra.mxu0 0.0
      %342 = vmatprep.subr.mxu0 0.0
      %343 = vmatpush1.msra.mxu0 %v317
      %344 = vmatprep.subr.mxu0 0.0
      %345 = vmatpush1.msra.mxu0 %v316
      %346 = vmatprep.subr.mxu0 0.0
      %347 = vmatpush1.msra.mxu0 %v315
      %348 = vmatprep.subr.mxu0 0.0
      %349 = vmatpush1.msra.mxu0 %v314
      %350 = vmatprep.subr.mxu0 0.0
      %351 = vmatpush2.msra.mxu0 0.0
      %352 = vmatprep.subr.mxu0 0.0
      %353 = vmatpush2.msra.mxu0 0.0
      %354 = vmatprep.subr.mxu0 0.0
      %355 = vmatpush2.msra.mxu0 0.0
      %356 = vmatprep.subr.mxu0 0.0
      %357 = vmatpush2.msra.mxu0 0.0
      %358 = vmatprep.subr.mxu0 0.0
      %359 = vmatpush2.msra.mxu0 0.0
      %360 = vmatprep.subr.mxu0 0.0
      %361 = vmatpush2.msra.mxu0 0.0
      %362 = vmatprep.subr.mxu0 0.0
      %363 = vmatpush2.msra.mxu0 0.0
      %364 = vmatprep.subr.mxu0 0.0
      %365 = vmatpush2.msra.mxu0 0.0
      %366 = vmatprep.subr.mxu0 0.0
      %367 = vmatpush2.msra.mxu0 0.0
      %368 = vmatprep.subr.mxu0 0.0
      %369 = vmatpush2.msra.mxu0 0.0
      %370 = vmatprep.subr.mxu0 0.0
      %371 = vmatpush2.msra.mxu0 0.0
      %372 = vmatprep.subr.mxu0 0.0
      %373 = vmatpush2.msra.mxu0 0.0
      %374 = vmatprep.subr.mxu0 0.0
      %375 = vmatpush2.msra.mxu0 0.0
      %376 = vmatprep.subr.mxu0 0.0
      %377 = vmatpush2.msra.mxu0 0.0
      %378 = vmatprep.subr.mxu0 0.0
      %379 = vmatpush2.msra.mxu0 0.0
      %380 = vmatprep.subr.mxu0 0.0
      %381 = vmatpush2.msra.mxu0 0.0
      %382 = vmatprep.mubr.f32.mxu0 0.0
      %383 = vmatmul.mubr.f32.gmra.mxu0 %v218
      %v384 = vpop.f32.mrf.mxu0
      %v385 = vadd.f32 %v212, %v384
      %v386 = vpop.f32.mrf.mxu0
      %387 = vmatprep.mubr.f32.mxu0 0.0
      %388 = vmatmul.mubr.f32.gmra.mxu0 %v221
      %v389 = vpop.f32.mrf.mxu0
      %v390 = vadd.f32 %v213, %v389
      %v391 = vpop.f32.mrf.mxu0
      %392 = vmatprep.mubr.f32.mxu0 0.0
      %393 = vmatmul.mubr.f32.gmra.mxu0 %v224
      %v394 = vpop.f32.mrf.mxu0
      %v395 = vadd.f32 %v214, %v394
      %v396 = vpop.f32.mrf.mxu0
      %397 = vmatprep.mubr.f32.mxu0 0.0
      %398 = vmatmul.mubr.f32.gmra.mxu0 %v227
      %v399 = vpop.f32.mrf.mxu0
      %v400 = vadd.f32 %v215, %v399
      %v401 = vpop.f32.mrf.mxu0
      %402 = vdwg.mxu0
      %v403 = vmax.f32 %v385, 0.0
      %v404 = vmax.f32 %v390, 0.0
      %v405 = vmax.f32 %v395, 0.0
      %v406 = vmax.f32 %v400, 0.0
      %407 = vmatprep.subr.mxu0 0.0
      %408 = vmatpush1.msra.mxu0 0.0
      %409 = vmatprep.subr.mxu0 0.0
      %410 = vmatpush1.msra.mxu0 0.0
      %411 = vmatprep.subr.mxu0 0.0
      %412 = vmatpush1.msra.mxu0 0.0
      %413 = vmatprep.subr.mxu0 0.0
      %414 = vmatpush1.msra.mxu0 0.0
      %415 = vmatprep.subr.mxu0 0.0
      %416 = vmatpush1.msra.mxu0 0.0
      %417 = vmatprep.subr.mxu0 0.0
      %418 = vmatpush1.msra.mxu0 0.0
      %419 = vmatprep.subr.mxu0 0.0
      %420 = vmatpush1.msra.mxu0 0.0
      %421 = vmatprep.subr.mxu0 0.0
      %422 = vmatpush1.msra.mxu0 0.0
      %423 = vmatprep.subr.mxu0 0.0
      %424 = vmatpush1.msra.mxu0 0.0
      %425 = vmatprep.subr.mxu0 0.0
      %426 = vmatpush1.msra.mxu0 0.0
      %427 = vmatprep.subr.mxu0 0.0
      %428 = vmatpush1.msra.mxu0 0.0
      %429 = vmatprep.subr.mxu0 0.0
      %430 = vmatpush1.msra.mxu0 0.0
      %431 = vmatprep.subr.mxu0 0.0
      %432 = vmatpush1.msra.mxu0 %v406
      %433 = vmatprep.subr.mxu0 0.0
      %434 = vmatpush1.msra.mxu0 %v405
      %435 = vmatprep.subr.mxu0 0.0
      %436 = vmatpush1.msra.mxu0 %v404
      %437 = vmatprep.subr.mxu0 0.0
      %438 = vmatpush1.msra.mxu0 %v403
      %439 = vmatprep.subr.mxu0 0.0
      %440 = vmatpush2.msra.mxu0 0.0
      %441 = vmatprep.subr.mxu0 0.0
      %442 = vmatpush2.msra.mxu0 0.0
      %443 = vmatprep.subr.mxu0 0.0
      %444 = vmatpush2.msra.mxu0 0.0
      %445 = vmatprep.subr.mxu0 0.0
      %446 = vmatpush2.msra.mxu0 0.0
      %447 = vmatprep.subr.mxu0 0.0
      %448 = vmatpush2.msra.mxu0 0.0
      %449 = vmatprep.subr.mxu0 0.0
      %450 = vmatpush2.msra.mxu0 0.0
      %451 = vmatprep.subr.mxu0 0.0
      %452 = vmatpush2.msra.mxu0 0.0
      %453 = vmatprep.subr.mxu0 0.0
      %454 = vmatpush2.msra.mxu0 0.0
      %455 = vmatprep.subr.mxu0 0.0
      %456 = vmatpush2.msra.mxu0 0.0
      %457 = vmatprep.subr.mxu0 0.0
      %458 = vmatpush2.msra.mxu0 0.0
      %459 = vmatprep.subr.mxu0 0.0
      %460 = vmatpush2.msra.mxu0 0.0
      %461 = vmatprep.subr.mxu0 0.0
      %462 = vmatpush2.msra.mxu0 0.0
      %463 = vmatprep.subr.mxu0 0.0
      %464 = vmatpush2.msra.mxu0 0.0
      %465 = vmatprep.subr.mxu0 0.0
      %466 = vmatpush2.msra.mxu0 0.0
      %467 = vmatprep.subr.mxu0 0.0
      %468 = vmatpush2.msra.mxu0 0.0
      %469 = vmatprep.subr.mxu0 0.0
      %470 = vmatpush2.msra.mxu0 0.0
      %471 = vmatprep.mubr.f32.mxu0 0.0
      %472 = vmatmul.mubr.f32.gmra.mxu0 %v218
      %v473 = vpop.f32.mrf.mxu0
      %v474 = vadd.f32 %v212, %v473
      %v475 = vpop.f32.mrf.mxu0
      %476 = vmatprep.mubr.f32.mxu0 0.0
      %477 = vmatmul.mubr.f32.gmra.mxu0 %v221
      %v478 = vpop.f32.mrf.mxu0
      %v479 = vadd.f32 %v213, %v478
      %v480 = vpop.f32.mrf.mxu0
      %481 = vmatprep.mubr.f32.mxu0 0.0
      %482 = vmatmul.mubr.f32.gmra.mxu0 %v224
      %v483 = vpop.f32.mrf.mxu0
      %v484 = vadd.f32 %v214, %v483
      %v485 = vpop.f32.mrf.mxu0
      %486 = vmatprep.mubr.f32.mxu0 0.0
      %487 = vmatmul.mubr.f32.gmra.mxu0 %v227
      %v488 = vpop.f32.mrf.mxu0
      %v489 = vadd.f32 %v215, %v488
      %v490 = vpop.f32.mrf.mxu0
      %491 = vdwg.mxu0
      %v492 = vmax.f32 %v474, 0.0
      %v493 = vmax.f32 %v479, 0.0
      %v494 = vmax.f32 %v484, 0.0
      %v495 = vmax.f32 %v489, 0.0
      %496 = vmatprep.subr.mxu0 0.0
      %497 = vmatpush1.msra.mxu0 0.0
      %498 = vmatprep.subr.mxu0 0.0
      %499 = vmatpush1.msra.mxu0 0.0
      %500 = vmatprep.subr.mxu0 0.0
      %501 = vmatpush1.msra.mxu0 0.0
      %502 = vmatprep.subr.mxu0 0.0
      %503 = vmatpush1.msra.mxu0 0.0
      %504 = vmatprep.subr.mxu0 0.0
      %505 = vmatpush1.msra.mxu0 0.0
      %506 = vmatprep.subr.mxu0 0.0
      %507 = vmatpush1.msra.mxu0 0.0
      %508 = vmatprep.subr.mxu0 0.0
      %509 = vmatpush1.msra.mxu0 0.0
      %510 = vmatprep.subr.mxu0 0.0
      %511 = vmatpush1.msra.mxu0 0.0
      %512 = vmatprep.subr.mxu0 0.0
      %513 = vmatpush1.msra.mxu0 0.0
      %514 = vmatprep.subr.mxu0 0.0
      %515 = vmatpush1.msra.mxu0 0.0
      %516 = vmatprep.subr.mxu0 0.0
      %517 = vmatpush1.msra.mxu0 0.0
      %518 = vmatprep.subr.mxu0 0.0
      %519 = vmatpush1.msra.mxu0 0.0
      %520 = vmatprep.subr.mxu0 0.0
      %521 = vmatpush1.msra.mxu0 %v495
      %522 = vmatprep.subr.mxu0 0.0
      %523 = vmatpush1.msra.mxu0 %v494
      %524 = vmatprep.subr.mxu0 0.0
      %525 = vmatpush1.msra.mxu0 %v493
      %526 = vmatprep.subr.mxu0 0.0
      %527 = vmatpush1.msra.mxu0 %v492
      %528 = vmatprep.subr.mxu0 0.0
      %529 = vmatpush2.msra.mxu0 0.0
      %530 = vmatprep.subr.mxu0 0.0
      %531 = vmatpush2.msra.mxu0 0.0
      %532 = vmatprep.subr.mxu0 0.0
      %533 = vmatpush2.msra.mxu0 0.0
      %534 = vmatprep.subr.mxu0 0.0
      %535 = vmatpush2.msra.mxu0 0.0
      %536 = vmatprep.subr.mxu0 0.0
      %537 = vmatpush2.msra.mxu0 0.0
      %538 = vmatprep.subr.mxu0 0.0
      %539 = vmatpush2.msra.mxu0 0.0
      %540 = vmatprep.subr.mxu0 0.0
      %541 = vmatpush2.msra.mxu0 0.0
      %542 = vmatprep.subr.mxu0 0.0
      %543 = vmatpush2.msra.mxu0 0.0
      %544 = vmatprep.subr.mxu0 0.0
      %545 = vmatpush2.msra.mxu0 0.0
      %546 = vmatprep.subr.mxu0 0.0
      %547 = vmatpush2.msra.mxu0 0.0
      %548 = vmatprep.subr.mxu0 0.0
      %549 = vmatpush2.msra.mxu0 0.0
      %550 = vmatprep.subr.mxu0 0.0
      %551 = vmatpush2.msra.mxu0 0.0
      %552 = vmatprep.subr.mxu0 0.0
      %553 = vmatpush2.msra.mxu0 0.0
      %554 = vmatprep.subr.mxu0 0.0
      %555 = vmatpush2.msra.mxu0 0.0
      %556 = vmatprep.subr.mxu0 0.0
      %557 = vmatpush2.msra.mxu0 0.0
      %558 = vmatprep.subr.mxu0 0.0
      %559 = vmatpush2.msra.mxu0 0.0
      %560 = vmatprep.mubr.f32.mxu0 0.0
      %561 = vmatmul.mubr.f32.gmra.mxu0 %v218
      %v562 = vpop.f32.mrf.mxu0
      %v563 = vadd.f32 %v212, %v562
      %v564 = vpop.f32.mrf.mxu0
      %565 = vmatprep.mubr.f32.mxu0 0.0
      %566 = vmatmul.mubr.f32.gmra.mxu0 %v221
      %v567 = vpop.f32.mrf.mxu0
      %v568 = vadd.f32 %v213, %v567
      %v569 = vpop.f32.mrf.mxu0
      %570 = vmatprep.mubr.f32.mxu0 0.0
      %571 = vmatmul.mubr.f32.gmra.mxu0 %v224
      %v572 = vpop.f32.mrf.mxu0
      %v573 = vadd.f32 %v214, %v572
      %v574 = vpop.f32.mrf.mxu0
      %575 = vmatprep.mubr.f32.mxu0 0.0
      %576 = vmatmul.mubr.f32.gmra.mxu0 %v227
      %v577 = vpop.f32.mrf.mxu0
      %v578 = vadd.f32 %v215, %v577
      %v579 = vpop.f32.mrf.mxu0
      %580 = vdwg.mxu0
      %v581 = vmax.f32 %v563, 0.0
      %v582 = vmax.f32 %v568, 0.0
      %v583 = vmax.f32 %v573, 0.0
      %v584 = vmax.f32 %v578, 0.0
      %585 = vmatprep.subr.mxu0 0.0
      %586 = vmatpush1.msra.mxu0 0.0
      %587 = vmatprep.subr.mxu0 0.0
      %588 = vmatpush1.msra.mxu0 0.0
      %589 = vmatprep.subr.mxu0 0.0
      %590 = vmatpush1.msra.mxu0 0.0
      %591 = vmatprep.subr.mxu0 0.0
      %592 = vmatpush1.msra.mxu0 0.0
      %593 = vmatprep.subr.mxu0 0.0
      %594 = vmatpush1.msra.mxu0 0.0
      %595 = vmatprep.subr.mxu0 0.0
      %596 = vmatpush1.msra.mxu0 0.0
      %597 = vmatprep.subr.mxu0 0.0
      %598 = vmatpush1.msra.mxu0 0.0
      %599 = vmatprep.subr.mxu0 0.0
      %600 = vmatpush1.msra.mxu0 0.0
      %601 = vmatprep.subr.mxu0 0.0
      %602 = vmatpush1.msra.mxu0 0.0
      %603 = vmatprep.subr.mxu0 0.0
      %604 = vmatpush1.msra.mxu0 0.0
      %605 = vmatprep.subr.mxu0 0.0
      %606 = vmatpush1.msra.mxu0 0.0
      %607 = vmatprep.subr.mxu0 0.0
      %608 = vmatpush1.msra.mxu0 0.0
      %609 = vmatprep.subr.mxu0 0.0
      %610 = vmatpush1.msra.mxu0 %v584
      %611 = vmatprep.subr.mxu0 0.0
      %612 = vmatpush1.msra.mxu0 %v583
      %613 = vmatprep.subr.mxu0 0.0
      %614 = vmatpush1.msra.mxu0 %v582
      %615 = vmatprep.subr.mxu0 0.0
      %616 = vmatpush1.msra.mxu0 %v581
      %617 = vmatprep.subr.mxu0 0.0
      %618 = vmatpush2.msra.mxu0 0.0
      %619 = vmatprep.subr.mxu0 0.0
      %620 = vmatpush2.msra.mxu0 0.0
      %621 = vmatprep.subr.mxu0 0.0
      %622 = vmatpush2.msra.mxu0 0.0
      %623 = vmatprep.subr.mxu0 0.0
      %624 = vmatpush2.msra.mxu0 0.0
      %625 = vmatprep.subr.mxu0 0.0
      %626 = vmatpush2.msra.mxu0 0.0
      %627 = vmatprep.subr.mxu0 0.0
      %628 = vmatpush2.msra.mxu0 0.0
      %629 = vmatprep.subr.mxu0 0.0
      %630 = vmatpush2.msra.mxu0 0.0
      %631 = vmatprep.subr.mxu0 0.0
      %632 = vmatpush2.msra.mxu0 0.0
      %633 = vmatprep.subr.mxu0 0.0
      %634 = vmatpush2.msra.mxu0 0.0
      %635 = vmatprep.subr.mxu0 0.0
      %636 = vmatpush2.msra.mxu0 0.0
      %637 = vmatprep.subr.mxu0 0.0
      %638 = vmatpush2.msra.mxu0 0.0
      %639 = vmatprep.subr.mxu0 0.0
      %640 = vmatpush2.msra.mxu0 0.0
      %641 = vmatprep.subr.mxu0 0.0
      %642 = vmatpush2.msra.mxu0 0.0
      %643 = vmatprep.subr.mxu0 0.0
      %644 = vmatpush2.msra.mxu0 0.0
      %645 = vmatprep.subr.mxu0 0.0
      %646 = vmatpush2.msra.mxu0 0.0
      %647 = vmatprep.subr.mxu0 0.0
      %648 = vmatpush2.msra.mxu0 0.0
      %649 = vmatprep.mubr.f32.mxu0 0.0
      %650 = vmatmul.mubr.f32.gmra.mxu0 %v218
      %v651 = vpop.f32.mrf.mxu0
      %v652 = vadd.f32 %v212, %v651
      %v653 = vpop.f32.mrf.mxu0
      %654 = vmatprep.mubr.f32.mxu0 0.0
      %655 = vmatmul.mubr.f32.gmra.mxu0 %v221
      %v656 = vpop.f32.mrf.mxu0
      %v657 = vadd.f32 %v213, %v656
      %v658 = vpop.f32.mrf.mxu0
      %659 = vmatprep.mubr.f32.mxu0 0.0
      %660 = vmatmul.mubr.f32.gmra.mxu0 %v224
      %v661 = vpop.f32.mrf.mxu0
      %v662 = vadd.f32 %v214, %v661
      %v663 = vpop.f32.mrf.mxu0
      %664 = vmatprep.mubr.f32.mxu0 0.0
      %665 = vmatmul.mubr.f32.gmra.mxu0 %v227
      %v666 = vpop.f32.mrf.mxu0
      %v667 = vadd.f32 %v215, %v666
      %v668 = vpop.f32.mrf.mxu0
      %669 = vdwg.mxu0
      %v670 = vmax.f32 %v652, 0.0
      %v671 = vmax.f32 %v657, 0.0
      %v672 = vmax.f32 %v662, 0.0
      %v673 = vmax.f32 %v667, 0.0
      %674 = vmatprep.subr.mxu0 0.0
      %675 = vmatpush1.msra.mxu0 0.0
      %676 = vmatprep.subr.mxu0 0.0
      %677 = vmatpush1.msra.mxu0 0.0
      %678 = vmatprep.subr.mxu0 0.0
      %679 = vmatpush1.msra.mxu0 0.0
      %680 = vmatprep.subr.mxu0 0.0
      %681 = vmatpush1.msra.mxu0 0.0
      %682 = vmatprep.subr.mxu0 0.0
      %683 = vmatpush1.msra.mxu0 0.0
      %684 = vmatprep.subr.mxu0 0.0
      %685 = vmatpush1.msra.mxu0 0.0
      %686 = vmatprep.subr.mxu0 0.0
      %687 = vmatpush1.msra.mxu0 0.0
      %688 = vmatprep.subr.mxu0 0.0
      %689 = vmatpush1.msra.mxu0 0.0
      %690 = vmatprep.subr.mxu0 0.0
      %691 = vmatpush1.msra.mxu0 0.0
      %692 = vmatprep.subr.mxu0 0.0
      %693 = vmatpush1.msra.mxu0 0.0
      %694 = vmatprep.subr.mxu0 0.0
      %695 = vmatpush1.msra.mxu0 0.0
      %696 = vmatprep.subr.mxu0 0.0
      %697 = vmatpush1.msra.mxu0 0.0
      %698 = vmatprep.subr.mxu0 0.0
      %699 = vmatpush1.msra.mxu0 %v673
      %700 = vmatprep.subr.mxu0 0.0
      %701 = vmatpush1.msra.mxu0 %v672
      %702 = vmatprep.subr.mxu0 0.0
      %703 = vmatpush1.msra.mxu0 %v671
      %704 = vmatprep.subr.mxu0 0.0
      %705 = vmatpush1.msra.mxu0 %v670
      %706 = vmatprep.subr.mxu0 0.0
      %707 = vmatpush2.msra.mxu0 0.0
      %708 = vmatprep.subr.mxu0 0.0
      %709 = vmatpush2.msra.mxu0 0.0
      %710 = vmatprep.subr.mxu0 0.0
      %711 = vmatpush2.msra.mxu0 0.0
      %712 = vmatprep.subr.mxu0 0.0
      %713 = vmatpush2.msra.mxu0 0.0
      %714 = vmatprep.subr.mxu0 0.0
      %715 = vmatpush2.msra.mxu0 0.0
      %716 = vmatprep.subr.mxu0 0.0
      %717 = vmatpush2.msra.mxu0 0.0
      %718 = vmatprep.subr.mxu0 0.0
      %719 = vmatpush2.msra.mxu0 0.0
      %720 = vmatprep.subr.mxu0 0.0
      %721 = vmatpush2.msra.mxu0 0.0
      %722 = vmatprep.subr.mxu0 0.0
      %723 = vmatpush2.msra.mxu0 0.0
      %724 = vmatprep.subr.mxu0 0.0
      %725 = vmatpush2.msra.mxu0 0.0
      %726 = vmatprep.subr.mxu0 0.0
      %727 = vmatpush2.msra.mxu0 0.0
      %728 = vmatprep.subr.mxu0 0.0
      %729 = vmatpush2.msra.mxu0 0.0
      %730 = vmatprep.subr.mxu0 0.0
      %731 = vmatpush2.msra.mxu0 0.0
      %732 = vmatprep.subr.mxu0 0.0
      %733 = vmatpush2.msra.mxu0 0.0
      %734 = vmatprep.subr.mxu0 0.0
      %735 = vmatpush2.msra.mxu0 0.0
      %736 = vmatprep.subr.mxu0 0.0
      %737 = vmatpush2.msra.mxu0 0.0
      %738 = vmatprep.mubr.f32.mxu0 0.0
      %739 = vmatmul.mubr.f32.gmra.mxu0 %v218
      %v740 = vpop.f32.mrf.mxu0
      %v741 = vadd.f32 %v212, %v740
      %v742 = vpop.f32.mrf.mxu0
      %743 = vmatprep.mubr.f32.mxu0 0.0
      %744 = vmatmul.mubr.f32.gmra.mxu0 %v221
      %v745 = vpop.f32.mrf.mxu0
      %v746 = vadd.f32 %v213, %v745
      %v747 = vpop.f32.mrf.mxu0
      %748 = vmatprep.mubr.f32.mxu0 0.0
      %749 = vmatmul.mubr.f32.gmra.mxu0 %v224
      %v750 = vpop.f32.mrf.mxu0
      %v751 = vadd.f32 %v214, %v750
      %v752 = vpop.f32.mrf.mxu0
      %753 = vmatprep.mubr.f32.mxu0 0.0
      %754 = vmatmul.mubr.f32.gmra.mxu0 %v227
      %v755 = vpop.f32.mrf.mxu0
      %v756 = vadd.f32 %v215, %v755
      %v757 = vpop.f32.mrf.mxu0
      %758 = vdwg.mxu0
      %v759 = vmax.f32 %v741, 0.0
      %v760 = vmax.f32 %v746, 0.0
      %v761 = vmax.f32 %v751, 0.0
      %v762 = vmax.f32 %v756, 0.0
      %763 = vmatprep.subr.mxu0 0.0
      %764 = vmatpush1.msra.mxu0 0.0
      %765 = vmatprep.subr.mxu0 0.0
      %766 = vmatpush1.msra.mxu0 0.0
      %767 = vmatprep.subr.mxu0 0.0
      %768 = vmatpush1.msra.mxu0 0.0
      %769 = vmatprep.subr.mxu0 0.0
      %770 = vmatpush1.msra.mxu0 0.0
      %771 = vmatprep.subr.mxu0 0.0
      %772 = vmatpush1.msra.mxu0 0.0
      %773 = vmatprep.subr.mxu0 0.0
      %774 = vmatpush1.msra.mxu0 0.0
      %775 = vmatprep.subr.mxu0 0.0
      %776 = vmatpush1.msra.mxu0 0.0
      %777 = vmatprep.subr.mxu0 0.0
      %778 = vmatpush1.msra.mxu0 0.0
      %779 = vmatprep.subr.mxu0 0.0
      %780 = vmatpush1.msra.mxu0 0.0
      %781 = vmatprep.subr.mxu0 0.0
      %782 = vmatpush1.msra.mxu0 0.0
      %783 = vmatprep.subr.mxu0 0.0
      %784 = vmatpush1.msra.mxu0 0.0
      %785 = vmatprep.subr.mxu0 0.0
      %786 = vmatpush1.msra.mxu0 0.0
      %787 = vmatprep.subr.mxu0 0.0
      %788 = vmatpush1.msra.mxu0 %v762
      %789 = vmatprep.subr.mxu0 0.0
      %790 = vmatpush1.msra.mxu0 %v761
      %791 = vmatprep.subr.mxu0 0.0
      %792 = vmatpush1.msra.mxu0 %v760
      %793 = vmatprep.subr.mxu0 0.0
      %794 = vmatpush1.msra.mxu0 %v759
      %795 = vmatprep.subr.mxu0 0.0
      %796 = vmatpush2.msra.mxu0 0.0
      %797 = vmatprep.subr.mxu0 0.0
      %798 = vmatpush2.msra.mxu0 0.0
      %799 = vmatprep.subr.mxu0 0.0
      %800 = vmatpush2.msra.mxu0 0.0
      %801 = vmatprep.subr.mxu0 0.0
      %802 = vmatpush2.msra.mxu0 0.0
      %803 = vmatprep.subr.mxu0 0.0
      %804 = vmatpush2.msra.mxu0 0.0
      %805 = vmatprep.subr.mxu0 0.0
      %806 = vmatpush2.msra.mxu0 0.0
      %807 = vmatprep.subr.mxu0 0.0
      %808 = vmatpush2.msra.mxu0 0.0
      %809 = vmatprep.subr.mxu0 0.0
      %810 = vmatpush2.msra.mxu0 0.0
      %811 = vmatprep.subr.mxu0 0.0
      %812 = vmatpush2.msra.mxu0 0.0
      %813 = vmatprep.subr.mxu0 0.0
      %814 = vmatpush2.msra.mxu0 0.0
      %815 = vmatprep.subr.mxu0 0.0
      %816 = vmatpush2.msra.mxu0 0.0
      %817 = vmatprep.subr.mxu0 0.0
      %818 = vmatpush2.msra.mxu0 0.0
      %819 = vmatprep.subr.mxu0 0.0
      %820 = vmatpush2.msra.mxu0 0.0
      %821 = vmatprep.subr.mxu0 0.0
      %822 = vmatpush2.msra.mxu0 0.0
      %823 = vmatprep.subr.mxu0 0.0
      %824 = vmatpush2.msra.mxu0 0.0
      %825 = vmatprep.subr.mxu0 0.0
      %826 = vmatpush2.msra.mxu0 0.0
      %827 = vmatprep.mubr.f32.mxu0 0.0
      %828 = vmatmul.mubr.f32.gmra.mxu0 %v218
      %v829 = vpop.f32.mrf.mxu0
      %v830 = vadd.f32 %v212, %v829
      %v831 = vpop.f32.mrf.mxu0
      %832 = vmatprep.mubr.f32.mxu0 0.0
      %833 = vmatmul.mubr.f32.gmra.mxu0 %v221
      %v834 = vpop.f32.mrf.mxu0
      %v835 = vadd.f32 %v213, %v834
      %v836 = vpop.f32.mrf.mxu0
      %837 = vmatprep.mubr.f32.mxu0 0.0
      %838 = vmatmul.mubr.f32.gmra.mxu0 %v224
      %v839 = vpop.f32.mrf.mxu0
      %v840 = vadd.f32 %v214, %v839
      %v841 = vpop.f32.mrf.mxu0
      %842 = vmatprep.mubr.f32.mxu0 0.0
      %843 = vmatmul.mubr.f32.gmra.mxu0 %v227
      %v844 = vpop.f32.mrf.mxu0
      %v845 = vadd.f32 %v215, %v844
      %v846 = vpop.f32.mrf.mxu0
      %847 = vdwg.mxu0
      %v848 = vmax.f32 %v830, 0.0
      %v849 = vmax.f32 %v835, 0.0
      %v850 = vmax.f32 %v840, 0.0
      %v851 = vmax.f32 %v845, 0.0
      %852 = vmatprep.subr.mxu0 0.0
      %853 = vmatpush1.msra.mxu0 0.0
      %854 = vmatprep.subr.mxu0 0.0
      %855 = vmatpush1.msra.mxu0 0.0
      %856 = vmatprep.subr.mxu0 0.0
      %857 = vmatpush1.msra.mxu0 0.0
      %858 = vmatprep.subr.mxu0 0.0
      %859 = vmatpush1.msra.mxu0 0.0
      %860 = vmatprep.subr.mxu0 0.0
      %861 = vmatpush1.msra.mxu0 0.0
      %862 = vmatprep.subr.mxu0 0.0
      %863 = vmatpush1.msra.mxu0 0.0
      %864 = vmatprep.subr.mxu0 0.0
      %865 = vmatpush1.msra.mxu0 0.0
      %866 = vmatprep.subr.mxu0 0.0
      %867 = vmatpush1.msra.mxu0 0.0
      %868 = vmatprep.subr.mxu0 0.0
      %869 = vmatpush1.msra.mxu0 0.0
      %870 = vmatprep.subr.mxu0 0.0
      %871 = vmatpush1.msra.mxu0 0.0
      %872 = vmatprep.subr.mxu0 0.0
      %873 = vmatpush1.msra.mxu0 0.0
      %874 = vmatprep.subr.mxu0 0.0
      %875 = vmatpush1.msra.mxu0 0.0
      %876 = vmatprep.subr.mxu0 0.0
      %877 = vmatpush1.msra.mxu0 %v851
      %878 = vmatprep.subr.mxu0 0.0
      %879 = vmatpush1.msra.mxu0 %v850
      %880 = vmatprep.subr.mxu0 0.0
      %881 = vmatpush1.msra.mxu0 %v849
      %882 = vmatprep.subr.mxu0 0.0
      %883 = vmatpush1.msra.mxu0 %v848
      %884 = vmatprep.subr.mxu0 0.0
      %885 = vmatpush2.msra.mxu0 0.0
      %886 = vmatprep.subr.mxu0 0.0
      %887 = vmatpush2.msra.mxu0 0.0
      %888 = vmatprep.subr.mxu0 0.0
      %889 = vmatpush2.msra.mxu0 0.0
      %890 = vmatprep.subr.mxu0 0.0
      %891 = vmatpush2.msra.mxu0 0.0
      %892 = vmatprep.subr.mxu0 0.0
      %893 = vmatpush2.msra.mxu0 0.0
      %894 = vmatprep.subr.mxu0 0.0
      %895 = vmatpush2.msra.mxu0 0.0
      %896 = vmatprep.subr.mxu0 0.0
      %897 = vmatpush2.msra.mxu0 0.0
      %898 = vmatprep.subr.mxu0 0.0
      %899 = vmatpush2.msra.mxu0 0.0
      %900 = vmatprep.subr.mxu0 0.0
      %901 = vmatpush2.msra.mxu0 0.0
      %902 = vmatprep.subr.mxu0 0.0
      %903 = vmatpush2.msra.mxu0 0.0
      %904 = vmatprep.subr.mxu0 0.0
      %905 = vmatpush2.msra.mxu0 0.0
      %906 = vmatprep.subr.mxu0 0.0
      %907 = vmatpush2.msra.mxu0 0.0
      %908 = vmatprep.subr.mxu0 0.0
      %909 = vmatpush2.msra.mxu0 0.0
      %910 = vmatprep.subr.mxu0 0.0
      %911 = vmatpush2.msra.mxu0 0.0
      %912 = vmatprep.subr.mxu0 0.0
      %913 = vmatpush2.msra.mxu0 0.0
      %914 = vmatprep.subr.mxu0 0.0
      %915 = vmatpush2.msra.mxu0 0.0
      %916 = vmatprep.mubr.f32.mxu0 0.0
      %917 = vmatmul.mubr.f32.gmra.mxu0 %v218
      %v918 = vpop.f32.mrf.mxu0
      %v919 = vadd.f32 %v212, %v918
      %v920 = vpop.f32.mrf.mxu0
      %921 = vmatprep.mubr.f32.mxu0 0.0
      %922 = vmatmul.mubr.f32.gmra.mxu0 %v221
      %v923 = vpop.f32.mrf.mxu0
      %v924 = vadd.f32 %v213, %v923
      %v925 = vpop.f32.mrf.mxu0
      %926 = vmatprep.mubr.f32.mxu0 0.0
      %927 = vmatmul.mubr.f32.gmra.mxu0 %v224
      %v928 = vpop.f32.mrf.mxu0
      %v929 = vadd.f32 %v214, %v928
      %v930 = vpop.f32.mrf.mxu0
      %931 = vmatprep.mubr.f32.mxu0 0.0
      %932 = vmatmul.mubr.f32.gmra.mxu0 %v227
      %v933 = vpop.f32.mrf.mxu0
      %v934 = vadd.f32 %v215, %v933
      %v935 = vpop.f32.mrf.mxu0
      %936 = vdwg.mxu0
      %v937 = vmax.f32 %v919, 0.0
      %v938 = vmax.f32 %v924, 0.0
      %v939 = vmax.f32 %v929, 0.0
      %v940 = vmax.f32 %v934, 0.0
      %941 = vmatprep.subr.mxu0 0.0
      %942 = vmatpush1.msra.mxu0 0.0
      %943 = vmatprep.subr.mxu0 0.0
      %944 = vmatpush1.msra.mxu0 0.0
      %945 = vmatprep.subr.mxu0 0.0
      %946 = vmatpush1.msra.mxu0 0.0
      %947 = vmatprep.subr.mxu0 0.0
      %948 = vmatpush1.msra.mxu0 0.0
      %949 = vmatprep.subr.mxu0 0.0
      %950 = vmatpush1.msra.mxu0 0.0
      %951 = vmatprep.subr.mxu0 0.0
      %952 = vmatpush1.msra.mxu0 0.0
      %953 = vmatprep.subr.mxu0 0.0
      %954 = vmatpush1.msra.mxu0 0.0
      %955 = vmatprep.subr.mxu0 0.0
      %956 = vmatpush1.msra.mxu0 0.0
      %957 = vmatprep.subr.mxu0 0.0
      %958 = vmatpush1.msra.mxu0 0.0
      %959 = vmatprep.subr.mxu0 0.0
      %960 = vmatpush1.msra.mxu0 0.0
      %961 = vmatprep.subr.mxu0 0.0
      %962 = vmatpush1.msra.mxu0 0.0
      %963 = vmatprep.subr.mxu0 0.0
      %964 = vmatpush1.msra.mxu0 0.0
      %965 = vmatprep.subr.mxu0 0.0
      %966 = vmatpush1.msra.mxu0 %v940
      %967 = vmatprep.subr.mxu0 0.0
      %968 = vmatpush1.msra.mxu0 %v939
      %969 = vmatprep.subr.mxu0 0.0
      %970 = vmatpush1.msra.mxu0 %v938
      %971 = vmatprep.subr.mxu0 0.0
      %972 = vmatpush1.msra.mxu0 %v937
      %973 = vmatprep.subr.mxu0 0.0
      %974 = vmatpush2.msra.mxu0 0.0
      %975 = vmatprep.subr.mxu0 0.0
      %976 = vmatpush2.msra.mxu0 0.0
      %977 = vmatprep.subr.mxu0 0.0
      %978 = vmatpush2.msra.mxu0 0.0
      %979 = vmatprep.subr.mxu0 0.0
      %980 = vmatpush2.msra.mxu0 0.0
      %981 = vmatprep.subr.mxu0 0.0
      %982 = vmatpush2.msra.mxu0 0.0
      %983 = vmatprep.subr.mxu0 0.0
      %984 = vmatpush2.msra.mxu0 0.0
      %985 = vmatprep.subr.mxu0 0.0
      %986 = vmatpush2.msra.mxu0 0.0
      %987 = vmatprep.subr.mxu0 0.0
      %988 = vmatpush2.msra.mxu0 0.0
      %989 = vmatprep.subr.mxu0 0.0
      %990 = vmatpush2.msra.mxu0 0.0
      %991 = vmatprep.subr.mxu0 0.0
      %992 = vmatpush2.msra.mxu0 0.0
      %993 = vmatprep.subr.mxu0 0.0
      %994 = vmatpush2.msra.mxu0 0.0
      %995 = vmatprep.subr.mxu0 0.0
      %996 = vmatpush2.msra.mxu0 0.0
      %997 = vmatprep.subr.mxu0 0.0
      %998 = vmatpush2.msra.mxu0 0.0
      %999 = vmatprep.subr.mxu0 0.0
      %1000 = vmatpush2.msra.mxu0 0.0
      %1001 = vmatprep.subr.mxu0 0.0
      %1002 = vmatpush2.msra.mxu0 0.0
      %1003 = vmatprep.subr.mxu0 0.0
      %1004 = vmatpush2.msra.mxu0 0.0
      %1005 = vmatprep.mubr.f32.mxu0 0.0
      %1006 = vmatmul.mubr.f32.gmra.mxu0 %v218
      %v1007 = vpop.f32.mrf.mxu0
      %v1008 = vadd.f32 %v212, %v1007
      %v1009 = vpop.f32.mrf.mxu0
      %1010 = vmatprep.mubr.f32.mxu0 0.0
      %1011 = vmatmul.mubr.f32.gmra.mxu0 %v221
      %v1012 = vpop.f32.mrf.mxu0
      %v1013 = vadd.f32 %v213, %v1012
      %v1014 = vpop.f32.mrf.mxu0
      %1015 = vmatprep.mubr.f32.mxu0 0.0
      %1016 = vmatmul.mubr.f32.gmra.mxu0 %v224
      %v1017 = vpop.f32.mrf.mxu0
      %v1018 = vadd.f32 %v214, %v1017
      %v1019 = vpop.f32.mrf.mxu0
      %1020 = vmatprep.mubr.f32.mxu0 0.0
      %1021 = vmatmul.mubr.f32.gmra.mxu0 %v227
      %v1022 = vpop.f32.mrf.mxu0
      %v1023 = vadd.f32 %v215, %v1022
      %v1024 = vpop.f32.mrf.mxu0
      %1025 = vdwg.mxu0
      %v1026 = vmax.f32 %v1008, 0.0
      %v1027 = vmax.f32 %v1013, 0.0
      %v1028 = vmax.f32 %v1018, 0.0
      %v1029 = vmax.f32 %v1023, 0.0
      %1030 = vmatprep.subr.mxu0 0.0
      %1031 = vmatpush1.msra.mxu0 0.0
      %1032 = vmatprep.subr.mxu0 0.0
      %1033 = vmatpush1.msra.mxu0 0.0
      %1034 = vmatprep.subr.mxu0 0.0
      %1035 = vmatpush1.msra.mxu0 0.0
      %1036 = vmatprep.subr.mxu0 0.0
      %1037 = vmatpush1.msra.mxu0 0.0
      %1038 = vmatprep.subr.mxu0 0.0
      %1039 = vmatpush1.msra.mxu0 0.0
      %1040 = vmatprep.subr.mxu0 0.0
      %1041 = vmatpush1.msra.mxu0 0.0
      %1042 = vmatprep.subr.mxu0 0.0
      %1043 = vmatpush1.msra.mxu0 0.0
      %1044 = vmatprep.subr.mxu0 0.0
      %1045 = vmatpush1.msra.mxu0 0.0
      %1046 = vmatprep.subr.mxu0 0.0
      %1047 = vmatpush1.msra.mxu0 0.0
      %1048 = vmatprep.subr.mxu0 0.0
      %1049 = vmatpush1.msra.mxu0 0.0
      %1050 = vmatprep.subr.mxu0 0.0
      %1051 = vmatpush1.msra.mxu0 0.0
      %1052 = vmatprep.subr.mxu0 0.0
      %1053 = vmatpush1.msra.mxu0 0.0
      %1054 = vmatprep.subr.mxu0 0.0
      %1055 = vmatpush1.msra.mxu0 %v1029
      %1056 = vmatprep.subr.mxu0 0.0
      %1057 = vmatpush1.msra.mxu0 %v1028
      %1058 = vmatprep.subr.mxu0 0.0
      %1059 = vmatpush1.msra.mxu0 %v1027
      %1060 = vmatprep.subr.mxu0 0.0
      %1061 = vmatpush1.msra.mxu0 %v1026
      %1062 = vmatprep.subr.mxu0 0.0
      %1063 = vmatpush2.msra.mxu0 0.0
      %1064 = vmatprep.subr.mxu0 0.0
      %1065 = vmatpush2.msra.mxu0 0.0
      %1066 = vmatprep.subr.mxu0 0.0
      %1067 = vmatpush2.msra.mxu0 0.0
      %1068 = vmatprep.subr.mxu0 0.0
      %1069 = vmatpush2.msra.mxu0 0.0
      %1070 = vmatprep.subr.mxu0 0.0
      %1071 = vmatpush2.msra.mxu0 0.0
      %1072 = vmatprep.subr.mxu0 0.0
      %1073 = vmatpush2.msra.mxu0 0.0
      %1074 = vmatprep.subr.mxu0 0.0
      %1075 = vmatpush2.msra.mxu0 0.0
      %1076 = vmatprep.subr.mxu0 0.0
      %1077 = vmatpush2.msra.mxu0 0.0
      %1078 = vmatprep.subr.mxu0 0.0
      %1079 = vmatpush2.msra.mxu0 0.0
      %1080 = vmatprep.subr.mxu0 0.0
      %1081 = vmatpush2.msra.mxu0 0.0
      %1082 = vmatprep.subr.mxu0 0.0
      %1083 = vmatpush2.msra.mxu0 0.0
      %1084 = vmatprep.subr.mxu0 0.0
      %1085 = vmatpush2.msra.mxu0 0.0
      %1086 = vmatprep.subr.mxu0 0.0
      %1087 = vmatpush2.msra.mxu0 0.0
      %1088 = vmatprep.subr.mxu0 0.0
      %1089 = vmatpush2.msra.mxu0 0.0
      %1090 = vmatprep.subr.mxu0 0.0
      %1091 = vmatpush2.msra.mxu0 0.0
      %1092 = vmatprep.subr.mxu0 0.0
      %1093 = vmatpush2.msra.mxu0 0.0
      %1094 = vmatprep.mubr.f32.mxu0 0.0
      %1095 = vmatmul.mubr.f32.gmra.mxu0 %v218
      %v1096 = vpop.f32.mrf.mxu0
      %v1097 = vadd.f32 %v212, %v1096
      %v1098 = vpop.f32.mrf.mxu0
      %1099 = vmatprep.mubr.f32.mxu0 0.0
      %1100 = vmatmul.mubr.f32.gmra.mxu0 %v221
      %v1101 = vpop.f32.mrf.mxu0
      %v1102 = vadd.f32 %v213, %v1101
      %v1103 = vpop.f32.mrf.mxu0
      %1104 = vmatprep.mubr.f32.mxu0 0.0
      %1105 = vmatmul.mubr.f32.gmra.mxu0 %v224
      %v1106 = vpop.f32.mrf.mxu0
      %v1107 = vadd.f32 %v214, %v1106
      %v1108 = vpop.f32.mrf.mxu0
      %1109 = vmatprep.mubr.f32.mxu0 0.0
      %1110 = vmatmul.mubr.f32.gmra.mxu0 %v227
      %v1111 = vpop.f32.mrf.mxu0
      %v1112 = vadd.f32 %v215, %v1111
      %v1113 = vpop.f32.mrf.mxu0
      %1114 = vdwg.mxu0
      %v1115 = vmax.f32 %v1097, 0.0
      %v1116 = vmax.f32 %v1102, 0.0
      %v1117 = vmax.f32 %v1107, 0.0
      %v1118 = vmax.f32 %v1112, 0.0
      %v1119 = vsub.f32 %v1115, %v1026
      %v1120 = vsub.f32 %v1116, %v1027
      %v1121 = vsub.f32 %v1117, %v1028
      %v1122 = vsub.f32 %v1118, %v1029
      %v1123 = vand.u32 2147483647, %v1119
      %v1124 = vand.u32 2147483647, %v1120
      %v1125 = vand.u32 2147483647, %v1121
      %v1126 = vand.u32 2147483647, %v1122
      %v1127 = vmax.f32 %v1123, %v1124
      %v1128 = vmax.f32 %v1125, %v1126
      %v1129 = vmax.f32 %v1127, %v1128
      %1130 = vmax.xlane.f32.xlu0 %v1129
      %v1131 = vpop.xlane.xlu0 %1130
      %v1132 = vrot.slane %v1131, 4
      %v1133 = vmax.f32 %v1131, %v1132
      %v1134 = vrot.slane %v1133, 2
      %v1135 = vmax.f32 %v1133, %v1134
      %v1136 = vrot.slane %v1135, 1
      %v1137 = vmax.f32 %v1135, %v1136
      %s1138 = vtos %v1137
      %p1139 = scmp.lt.f32.partialorder %s1138, 3e-06
      %s1140 = scalar_select %p1139, 1, 0
      %v1141 = vstv %s1140
      %vm1142 = vcmp.gt.s32.totalorder %v1141, 0
      %v1143 = vsel %vm1142, %v1026, %v1115
      %v1144 = vsel %vm1142, %v1027, %v1116
      %v1145 = vsel %vm1142, %v1028, %v1117
      %v1146 = vsel %vm1142, %v1029, %v1118
      %1147 = vst [vmem:[#allocation2] sm:$0xff] %v1143
      %1148 = vst [vmem:[#allocation2 + $0x8] sm:$0xff] %v1144
      %1149 = vst [vmem:[#allocation2 + $0x10] sm:$0xff] %v1145
      %1150 = vst [vmem:[#allocation2 + $0x18] sm:$0xff] %v1146
      %s1151 = sadd.s32 %s196, 10
    $region26: #{tpu_custom_call.1} parent=1 // loop_footer
      _
    $region27: #{tpu_custom_call.1} parent=1 // loop_footer_branch
      %195 = sbr.rel target = $region23
    $region28: #{tpu_custom_call.1} parent=1 // loop_exit
      _
    %v1152 = vld [vmem:[#allocation2] sm:$0xff]
    %v1153 = vld [vmem:[#allocation2 + $0x8] sm:$0xff]
    %v1154 = vld [vmem:[#allocation2 + $0x10] sm:$0xff]
    %v1155 = vld [vmem:[#allocation2 + $0x18] sm:$0xff]
    %v1156 = vld [vmem:[%s2] sm:$0xff]
    %v1157 = vld [vmem:[%s3] sm:$0xff]
    %v1158 = vld [vmem:[%s4] sm:$0xff]
    %v1159 = vld [vmem:[%s4 + $0x8] sm:$0xff]
    %v1160 = vld [vmem:[%s4 + $0x10] sm:$0xff]
    %v1161 = vld [vmem:[%s4 + $0x18] sm:$0xff]
    %v1162 = vld [vmem:[%s4 + $0x20] sm:$0xff]
    %v1163 = vld [vmem:[%s4 + $0x28] sm:$0xff]
    %v1164 = vld [vmem:[%s4 + $0x30] sm:$0xff]
    %v1165 = vld [vmem:[%s4 + $0x38] sm:$0xff]
    %v1166 = vld [vmem:[%s4 + $0x40] sm:$0xff]
    %v1167 = vld [vmem:[%s4 + $0x48] sm:$0xff]
    %v1168 = vld [vmem:[%s4 + $0x50] sm:$0xff]
    %v1169 = vld [vmem:[%s4 + $0x58] sm:$0xff]
    %v1170 = vld [vmem:[%s4 + $0x60] sm:$0xff]
    %v1171 = vld [vmem:[%s4 + $0x68] sm:$0xff]
    %v1172 = vld [vmem:[%s4 + $0x70] sm:$0xff]
    %v1173 = vld [vmem:[%s4 + $0x78] sm:$0xff]
    %v1175 = vsel %vm41, %v1157, 0
    %v1178 = vsel %vm41, %v1158, 0
    %v1181 = vsel %vm41, %v1159, 0
    %v1184 = vsel %vm41, %v1160, 0
    %v1187 = vsel %vm41, %v1161, 0
    %v1190 = vsel %vm41, %v1162, 0
    %v1193 = vsel %vm41, %v1163, 0
    %v1196 = vsel %vm41, %v1164, 0
    %v1199 = vsel %vm41, %v1165, 0
    %v1202 = vsel %vm41, %v1166, 0
    %v1205 = vsel %vm41, %v1167, 0
    %v1208 = vsel %vm41, %v1168, 0
    %v1211 = vsel %vm41, %v1169, 0
    %v1214 = vsel %vm41, %v1170, 0
    %v1217 = vsel %vm41, %v1171, 0
    %v1220 = vsel %vm41, %v1172, 0
    %v1223 = vsel %vm41, %v1173, 0
    %1225 = vmatprep.subr.mxu0 0.0
    %1226 = vmatpush1.xpose.msra.mxu0 %v1223
    %1227 = vmatprep.subr.mxu0 0.0
    %1228 = vmatpush1.xpose.msra.mxu0 %v1220
    %1229 = vmatprep.subr.mxu0 0.0
    %1230 = vmatpush1.xpose.msra.mxu0 %v1217
    %1231 = vmatprep.subr.mxu0 0.0
    %1232 = vmatpush1.xpose.msra.mxu0 %v1214
    %1233 = vmatprep.subr.mxu0 0.0
    %1234 = vmatpush1.xpose.msra.mxu0 %v1211
    %1235 = vmatprep.subr.mxu0 0.0
    %1236 = vmatpush1.xpose.msra.mxu0 %v1208
    %1237 = vmatprep.subr.mxu0 0.0
    %1238 = vmatpush1.xpose.msra.mxu0 %v1205
    %1239 = vmatprep.subr.mxu0 0.0
    %1240 = vmatpush1.xpose.msra.mxu0 %v1202
    %1241 = vmatprep.subr.mxu0 0.0
    %1242 = vmatpush1.xpose.msra.mxu0 %v1199
    %1243 = vmatprep.subr.mxu0 0.0
    %1244 = vmatpush1.xpose.msra.mxu0 %v1196
    %1245 = vmatprep.subr.mxu0 0.0
    %1246 = vmatpush1.xpose.msra.mxu0 %v1193
    %1247 = vmatprep.subr.mxu0 0.0
    %1248 = vmatpush1.xpose.msra.mxu0 %v1190
    %1249 = vmatprep.subr.mxu0 0.0
    %1250 = vmatpush1.xpose.msra.mxu0 %v1187
    %1251 = vmatprep.subr.mxu0 0.0
    %1252 = vmatpush1.xpose.msra.mxu0 %v1184
    %1253 = vmatprep.subr.mxu0 0.0
    %1254 = vmatpush1.xpose.msra.mxu0 %v1181
    %1255 = vmatprep.subr.mxu0 0.0
    %1256 = vmatpush1.xpose.msra.mxu0 %v1178
    %1257 = vmatprep.subr.mxu0 0.0
    %1258 = vmatpush2.xpose.msra.mxu0 0.0
    %1259 = vmatprep.subr.mxu0 0.0
    %1260 = vmatpush2.xpose.msra.mxu0 0.0
    %1261 = vmatprep.subr.mxu0 0.0
    %1262 = vmatpush2.xpose.msra.mxu0 0.0
    %1263 = vmatprep.subr.mxu0 0.0
    %1264 = vmatpush2.xpose.msra.mxu0 0.0
    %1265 = vmatprep.subr.mxu0 0.0
    %1266 = vmatpush2.xpose.msra.mxu0 0.0
    %1267 = vmatprep.subr.mxu0 0.0
    %1268 = vmatpush2.xpose.msra.mxu0 0.0
    %1269 = vmatprep.subr.mxu0 0.0
    %1270 = vmatpush2.xpose.msra.mxu0 0.0
    %1271 = vmatprep.subr.mxu0 0.0
    %1272 = vmatpush2.xpose.msra.mxu0 0.0
    %1273 = vmatprep.subr.mxu0 0.0
    %1274 = vmatpush2.xpose.msra.mxu0 0.0
    %1275 = vmatprep.subr.mxu0 0.0
    %1276 = vmatpush2.xpose.msra.mxu0 0.0
    %1277 = vmatprep.subr.mxu0 0.0
    %1278 = vmatpush2.xpose.msra.mxu0 0.0
    %1279 = vmatprep.subr.mxu0 0.0
    %1280 = vmatpush2.xpose.msra.mxu0 0.0
    %1281 = vmatprep.subr.mxu0 0.0
    %1282 = vmatpush2.xpose.msra.mxu0 0.0
    %1283 = vmatprep.subr.mxu0 0.0
    %1284 = vmatpush2.xpose.msra.mxu0 0.0
    %1285 = vmatprep.subr.mxu0 0.0
    %1286 = vmatpush2.xpose.msra.mxu0 0.0
    %1287 = vmatprep.subr.mxu0 0.0
    %1288 = vmatpush2.xpose.msra.mxu0 0.0
    %1289 = vmatprep.mubr.f32.mxu0 0.0
    %1290 = vmatmul.mubr.f32.gmra.mxu0 %v1175
    %v1291 = vpop.f32.mrf.mxu0
    %v1292 = vadd.f32 0.0, %v1291
    %v1293 = vpop.f32.mrf.mxu0
    %1294 = vdwg.mxu0
    %vm1295 = vcmask 261120
    %v1297 = vsel %vm1295, %v1156, 0
    %1299 = vmatprep.subr.mxu0 0.0
    %1300 = vmatpush1.msra.mxu0 0.0
    %1301 = vmatprep.subr.mxu0 0.0
    %1302 = vmatpush1.msra.mxu0 0.0
    %1303 = vmatprep.subr.mxu0 0.0
    %1304 = vmatpush1.msra.mxu0 0.0
    %1305 = vmatprep.subr.mxu0 0.0
    %1306 = vmatpush1.msra.mxu0 0.0
    %1307 = vmatprep.subr.mxu0 0.0
    %1308 = vmatpush1.msra.mxu0 0.0
    %1309 = vmatprep.subr.mxu0 0.0
    %1310 = vmatpush1.msra.mxu0 0.0
    %1311 = vmatprep.subr.mxu0 0.0
    %1312 = vmatpush1.msra.mxu0 0.0
    %1313 = vmatprep.subr.mxu0 0.0
    %1314 = vmatpush1.msra.mxu0 0.0
    %1315 = vmatprep.subr.mxu0 0.0
    %1316 = vmatpush1.msra.mxu0 0.0
    %1317 = vmatprep.subr.mxu0 0.0
    %1318 = vmatpush1.msra.mxu0 0.0
    %1319 = vmatprep.subr.mxu0 0.0
    %1320 = vmatpush1.msra.mxu0 0.0
    %1321 = vmatprep.subr.mxu0 0.0
    %1322 = vmatpush1.msra.mxu0 0.0
    %1323 = vmatprep.subr.mxu0 0.0
    %1324 = vmatpush1.msra.mxu0 %v1155
    %1325 = vmatprep.subr.mxu0 0.0
    %1326 = vmatpush1.msra.mxu0 %v1154
    %1327 = vmatprep.subr.mxu0 0.0
    %1328 = vmatpush1.msra.mxu0 %v1153
    %1329 = vmatprep.subr.mxu0 0.0
    %1330 = vmatpush1.msra.mxu0 %v1152
    %1331 = vmatprep.subr.mxu0 0.0
    %1332 = vmatpush2.msra.mxu0 0.0
    %1333 = vmatprep.subr.mxu0 0.0
    %1334 = vmatpush2.msra.mxu0 0.0
    %1335 = vmatprep.subr.mxu0 0.0
    %1336 = vmatpush2.msra.mxu0 0.0
    %1337 = vmatprep.subr.mxu0 0.0
    %1338 = vmatpush2.msra.mxu0 0.0
    %1339 = vmatprep.subr.mxu0 0.0
    %1340 = vmatpush2.msra.mxu0 0.0
    %1341 = vmatprep.subr.mxu0 0.0
    %1342 = vmatpush2.msra.mxu0 0.0
    %1343 = vmatprep.subr.mxu0 0.0
    %1344 = vmatpush2.msra.mxu0 0.0
    %1345 = vmatprep.subr.mxu0 0.0
    %1346 = vmatpush2.msra.mxu0 0.0
    %1347 = vmatprep.subr.mxu0 0.0
    %1348 = vmatpush2.msra.mxu0 0.0
    %1349 = vmatprep.subr.mxu0 0.0
    %1350 = vmatpush2.msra.mxu0 0.0
    %1351 = vmatprep.subr.mxu0 0.0
    %1352 = vmatpush2.msra.mxu0 0.0
    %1353 = vmatprep.subr.mxu0 0.0
    %1354 = vmatpush2.msra.mxu0 0.0
    %1355 = vmatprep.subr.mxu0 0.0
    %1356 = vmatpush2.msra.mxu0 0.0
    %1357 = vmatprep.subr.mxu0 0.0
    %1358 = vmatpush2.msra.mxu0 0.0
    %1359 = vmatprep.subr.mxu0 0.0
    %1360 = vmatpush2.msra.mxu0 0.0
    %1361 = vmatprep.subr.mxu0 0.0
    %1362 = vmatpush2.msra.mxu0 0.0
    %1363 = vmatprep.mubr.f32.mxu0 0.0
    %1364 = vmatmul.mubr.f32.gmra.mxu0 %v1297
    %v1365 = vpop.f32.mrf.mxu0
    %v1366 = vadd.f32 %v1292, %v1365
    %v1367 = vpop.f32.mrf.mxu0
    %1368 = vdwg.mxu0
    %1369 = vst [vmem:[#allocation4] sm:$0xff] %v1366
    // Predicated region
    $region29: #{tpu_custom_call.1} parent=1 // pred_check
      _
    $region30: #{tpu_custom_call.1} parent=1 // pred_check_branch
      %1371 = sbr.rel (0) target = $region32
    $region31: #{tpu_custom_call.1} parent=1 // pred_region
      %s1373 = ssub.s32 128, 128
      %1374 = vsyncadd [#allocation5], %s1373
      %s1376 = sshll.u32 [#allocation4], 4
      %s1377 = int_to_ptr.vmem [resolvable:$true] %s1376
      %1379 = dma.vmem_to_hbm [thread:$0]  %s1377, 128, %s5, [#allocation5]
    $region32: #{tpu_custom_call.1} parent=1 // pred_fallthru
      _
    // Predicated region
    $region33: #{tpu_custom_call.1} parent=1 // pred_check
      _
    $region34: #{tpu_custom_call.1} parent=1 // pred_check_branch
      %1381 = sbr.rel (0) target = $region36
    $region35: #{tpu_custom_call.1} parent=1 // pred_region
      %1382 = dma.done [#allocation5], 128
    $region36: #{tpu_custom_call.1} parent=1 // pred_fallthru
      _
    %1383 = vsyncpa [#allocation5], 1

</llo_original>
